<compile_context>
chip_gen: v7x
topology: tpu7x:2x2x1
jax: 0.10.0
libtpu: 0.0.40
codegen_flags: <defaults>
</compile_context>

<pallas_src>
import math

import jax
import jax.numpy as jnp
from jax.experimental import pallas as pl
from jax.experimental.pallas import tpu as pltpu

NEG_SENTINEL = -1e30  # finite "minus infinity" for masked neighbor slots


def _round_up(v, m):
    return ((v + m - 1) // m) * m


def _packed_width(C):
    # channels: [x (C) | pos_diff (3) | zero pad | negadd sentinel (last)]
    return _round_up(C + 3 + 1, 8)


# ----------------------------- Pallas kernel ------------------------------ #
def pointconv_kernel(e_ref, w1_ref, b1_ref, w2_ref, b2_ref, w3_ref, b3_ref,
                     o_ref):
    TM, K, Dp = e_ref.shape
    Fp = o_ref.shape[-1]

    e = e_ref[...]                                   # [TM, K, Dp] bf16
    neg = e[:, :, Dp - 1:Dp].astype(jnp.float32)     # [TM, K, 1] additive mask

    # Layer 1: single fused bf16 MXU matmul (leading-dim merge is layout-free
    # since K is a multiple of 8 and Dp is the full minor dim).
    h = jnp.dot(e.reshape(TM * K, Dp), w1_ref[...],
                preferred_element_type=jnp.float32)
    h = jnp.maximum(h + b1_ref[...], 0.0)            # [TM*K, H1p] f32

    # Layers 2/3: bf16 operands on the MXU, f32 accumulation, f32 epilogue.
    h = jnp.dot(h.astype(jnp.bfloat16), w2_ref[...],
                preferred_element_type=jnp.float32)
    h = jnp.maximum(h + b2_ref[...], 0.0)            # [TM*K, H2p] f32

    h = jnp.dot(h.astype(jnp.bfloat16), w3_ref[...],
                preferred_element_type=jnp.float32)
    h = jnp.maximum(h + b3_ref[...], 0.0)            # [TM*K, Fp] f32

    # Masked max over neighbors: additive finite sentinel, reduce K.
    h = h.reshape(TM, K, Fp) + neg
    o_ref[...] = jnp.max(h, axis=1)                  # [TM, Fp]


# ------------------------- wrapper / tiling logic -------------------------- #
def _default_tm_max():
    # v5e/v6e have 128 MiB VMEM -> bigger M-tile; v7x has 64 MiB -> tm<=64.
    try:
        vmem = pltpu.get_tpu_info().vmem_capacity_bytes
        return 128 if vmem >= 100 * 1024 * 1024 else 64
    except Exception:
        return 64


def _choose_tile(M, tm_max=None):
    if tm_max is None:
        tm_max = _default_tm_max()
    tm = min(tm_max, _round_up(M, 8))
    # Ensure >= 2 grid steps when possible so v7x megacore can split the grid.
    if -(-M // tm) < 2 and M > 8:
        tm = _round_up(-(-M // 2), 8)
    Mp = _round_up(M, tm)
    return tm, Mp


def pack_pointconv_params(params, C):
    """Zero-pad the MLP to lane-dense widths and cast weights to bf16."""
    w1, b1, w2, b2, w3, b3 = params
    Din, H1 = w1.shape
    H2 = w2.shape[1]
    F = w3.shape[1]
    assert Din == C + 3
    Dp = _packed_width(C)
    # TODO(synk): on v6e/v7x with H/F >= 256, round to 256 to fill both MXU
    #             column tiles per pass; 128 kept for simplicity here.
    H1p, H2p, Fp = (_round_up(h, 128) for h in (H1, H2, F))

    w1p = jnp.zeros((Dp, H1p), jnp.float32).at[:Din, :H1].set(w1)
    b1p = jnp.zeros((1, H1p), jnp.float32).at[:, :H1].set(b1)
    w2p = jnp.zeros((H1p, H2p), jnp.float32).at[:H1, :H2].set(w2)
    b2p = jnp.zeros((1, H2p), jnp.float32).at[:, :H2].set(b2)
    w3p = jnp.zeros((H2p, Fp), jnp.float32).at[:H2, :F].set(w3)
    b3p = jnp.zeros((1, Fp), jnp.float32).at[:, :F].set(b3)
    # Padded bias entries MUST stay exactly 0 so ReLU of padded columns is 0.
    return (w1p.astype(jnp.bfloat16), b1p, w2p.astype(jnp.bfloat16), b2p,
            w3p.astype(jnp.bfloat16), b3p)


def pointconv_pallas(edge, packed, *, M, F, tm):
    """edge [Mp, K, Dp] bf16 (negadd in last channel), packed = padded MLP."""
    Mp, K, Dp = edge.shape
    w1p, b1p, w2p, b2p, w3p, b3p = packed
    assert w1p.shape[0] == Dp and Mp % tm == 0
    H1p, H2p, Fp = w1p.shape[1], w2p.shape[1], w3p.shape[1]

    out = pl.pallas_call(
        pointconv_kernel,
        out_shape=jax.ShapeDtypeStruct((Mp, Fp), jnp.float32),
        grid_spec=pltpu.PrefetchScalarGridSpec(
            num_scalar_prefetch=0,
            grid=(Mp // tm,),
            in_specs=[
                pl.BlockSpec((tm, K, Dp), lambda i: (i, 0, 0)),   # edge
                pl.BlockSpec((Dp, H1p), lambda i: (0, 0)),        # w1 (bf16)
                pl.BlockSpec((1, H1p), lambda i: (0, 0)),         # b1
                pl.BlockSpec((H1p, H2p), lambda i: (0, 0)),       # w2 (bf16)
                pl.BlockSpec((1, H2p), lambda i: (0, 0)),         # b2
                pl.BlockSpec((H2p, Fp), lambda i: (0, 0)),        # w3 (bf16)
                pl.BlockSpec((1, Fp), lambda i: (0, 0)),          # b3
            ],
            out_specs=pl.BlockSpec((tm, Fp), lambda i: (i, 0)),
        ),
        compiler_params=pltpu.CompilerParams(
            dimension_semantics=("parallel",),
            vmem_limit_bytes=32 * 1024 * 1024),
    )(edge, w1p, b1p, w2p, b2p, w3p, b3p)

    return out[:M, :F]


# ------------------------------- JAX glue ---------------------------------- #
def fps_single(p, m):
    """Farthest point sampling on one batch (deterministic start at node 0,
    i.e. torch_cluster fps with random_start=False)."""
    sel0 = jnp.zeros((m,), jnp.int32)
    d0 = jnp.sum((p - p[0]) ** 2, axis=-1)

    def body(i, state):
        sel, d = state
        nxt = jnp.argmax(d).astype(jnp.int32)
        sel = sel.at[i].set(nxt)
        d = jnp.minimum(d, jnp.sum((p - p[nxt]) ** 2, axis=-1))
        return sel, d

    sel, _ = jax.lax.fori_loop(1, m, body, (sel0, d0))
    return sel


def fps_indices(pos, n_per_batch, num_batches, m_per):
    p = pos.reshape(num_batches, n_per_batch, pos.shape[-1])
    sel = jax.vmap(lambda pb: fps_single(pb, m_per))(p)          # [B, m_per]
    offs = (jnp.arange(num_batches, dtype=jnp.int32) * n_per_batch)[:, None]
    return (sel + offs).reshape(-1)


def build_neighbors(x, pos, batch, idx, r, max_neighbors, m_pad):
    """radius(pos, pos[idx], r, batch, batch[idx], max_num_neighbors) as a
    packed, padded edge tensor [m_pad, K, Dp] bf16 (negadd in last channel)."""
    N, C = x.shape
    M = idx.shape[0]
    Dp = _packed_width(C)

    if m_pad > M:
        idx_p = jnp.concatenate([idx, jnp.zeros((m_pad - M,), jnp.int32)])
    else:
        idx_p = idx
    row_valid = jnp.arange(m_pad, dtype=jnp.int32) < M

    q_pos = pos[idx_p]                                           # [Mp, 3]
    q_batch = batch[idx_p]                                       # [Mp]

    d2 = jnp.sum((q_pos[:, None, :] - pos[None, :, :]) ** 2, axis=-1)  # [Mp,N]
    valid = (d2 <= r * r) & (q_batch[:, None] == batch[None, :])
    valid = valid & row_valid[:, None]
    valid = valid & (jnp.cumsum(valid.astype(jnp.int32), axis=1)
                     <= max_neighbors)                  # cap neighbor count
    col = jnp.arange(N, dtype=jnp.int32)[None, :]
    sort_key = jnp.where(valid, col, N + col)
    K0 = min(max_neighbors, N)
    _, nbr_idx = jax.lax.top_k(-sort_key, K0)           # K0 smallest keys
    nbr_mask = jnp.take_along_axis(valid, nbr_idx, axis=1)

    K = _round_up(K0, 8)                                # sublane-friendly K
    if K > K0:
        nbr_idx = jnp.pad(nbr_idx, ((0, 0), (0, K - K0)))
        nbr_mask = jnp.pad(nbr_mask, ((0, 0), (0, K - K0)))

    x_j = x[nbr_idx]                                     # [Mp, K, C]
    pos_diff = pos[nbr_idx] - q_pos[:, None, :]          # [Mp, K, 3]
    neg = jnp.where(nbr_mask, 0.0, NEG_SENTINEL)         # [Mp, K] f32

    parts = [x_j, pos_diff]
    n_zero = Dp - (C + 3) - 1
    if n_zero > 0:
        parts.append(jnp.zeros((m_pad, K, n_zero), jnp.float32))
    parts.append(neg[:, :, None])
    edge = jnp.concatenate(parts, axis=-1).astype(jnp.bfloat16)  # [Mp, K, Dp]
    return edge, q_pos[:M], q_batch[:M]


def sa_module(x, pos, batch, *, ratio, r, n_per_batch, num_batches,
              max_neighbors, params, tm_max=None):
    m_per = int(math.ceil(ratio * n_per_batch))
    M = num_batches * m_per
    tm, Mp = _choose_tile(M, tm_max)

    # --- fps(pos, batch, ratio) ---
    idx = fps_indices(pos, n_per_batch, num_batches, m_per)      # [M]

    # --- radius + neighbor gather, packed + padded to Mp directly ---
    C = x.shape[1]
    edge, q_pos, q_batch = build_neighbors(
        x, pos, batch, idx, r, max_neighbors, Mp)

    # --- Pallas: per-edge MLP + masked max aggregation ---
    packed = pack_pointconv_params(params, C)
    F = params[4].shape[1]
    x_out = pointconv_pallas(edge, packed, M=M, F=F, tm=tm)

    return x_out, q_pos, q_batch


def ref_pointconv_packed(edge, packed, F):
    """Pure-JAX reference matching the kernel's mixed-precision math."""
    w1p, b1p, w2p, b2p, w3p, b3p = packed
    Mp, K, Dp = edge.shape
    neg = edge[:, :, Dp - 1:Dp].astype(jnp.float32)
    h = jnp.dot(edge.reshape(Mp * K, Dp), w1p,
                preferred_element_type=jnp.float32)
    h = jnp.maximum(h + b1p, 0.0)
    h = jnp.dot(h.astype(jnp.bfloat16), w2p, preferred_element_type=jnp.float32)
    h = jnp.maximum(h + b2p, 0.0)
    h = jnp.dot(h.astype(jnp.bfloat16), w3p, preferred_element_type=jnp.float32)
    h = jnp.maximum(h + b3p, 0.0)
    h = h.reshape(Mp, K, -1) + neg
    return jnp.max(h, axis=1)[:, :F]


# --------------------------------- main ------------------------------------ #
if __name__ == "__main__":
    key = jax.random.PRNGKey(0)
    B, n_per, C = 2, 16, 4          # 2 point clouds x 16 points, 4 feat chans
    N = B * n_per
    ratio, r = 0.5, 0.5
    MAX_NBR = 64
    H1, H2, F = 32, 32, 64
    Din = C + 3

    keys = jax.random.split(key, 8)
    pos = jax.random.uniform(keys[0], (N, 3), jnp.float32)
    x = jax.random.normal(keys[1], (N, C), jnp.float32)
    batch = jnp.repeat(jnp.arange(B, dtype=jnp.int32), n_per)

    w1 = 0.3 * jax.random.normal(keys[2], (Din, H1), jnp.float32)
    b1 = 0.1 * jax.random.normal(keys[3], (1, H1), jnp.float32)
    w2 = 0.2 * jax.random.normal(keys[4], (H1, H2), jnp.float32)
    b2 = 0.1 * jax.random.normal(keys[5], (1, H2), jnp.float32)
    w3 = 0.2 * jax.random.normal(keys[6], (H2, F), jnp.float32)
    b3 = 0.1 * jax.random.normal(keys[7], (1, F), jnp.float32)
    params = (w1, b1, w2, b2, w3, b3)

    x_out, pos_out, batch_out = sa_module(
        x, pos, batch, ratio=ratio, r=r, n_per_batch=n_per, num_batches=B,
        max_neighbors=MAX_NBR, params=params)
    jax.block_until_ready((x_out, pos_out, batch_out))

    m_per = int(math.ceil(ratio * n_per))
    M = B * m_per
    assert x_out.shape == (M, F)
    assert pos_out.shape == (M, 3)
    assert batch_out.shape == (M,)

    # Correctness check of the Pallas hot path against pure JAX (identical
    # mixed-precision math on the same packed edge tensor).
    tm, Mp = _choose_tile(M)
    idx = fps_indices(pos, n_per, B, m_per)
    edge, _, _ = build_neighbors(x, pos, batch, idx, r, MAX_NBR, Mp)
    packed = pack_pointconv_params(params, C)
    ref = ref_pointconv_packed(edge, packed, F)[:M]
    assert jnp.allclose(x_out, ref, rtol=2e-2, atol=2e-2), "mismatch vs ref"
    assert bool(jnp.all(jnp.isfinite(x_out))), "non-finite output"

    print("KERNEL_OK")
</pallas_src>

<mosaic_0001>
module attributes {stable_mosaic.version = 11 : i64} {
  func.func @pointconv_kernel(%arg0: i32, %arg1: memref<8x32x8xbf16, #tpu.memory_space<vmem>>, %arg2: memref<8x128xbf16, #tpu.memory_space<vmem>>, %arg3: memref<1x128xf32, #tpu.memory_space<vmem>>, %arg4: memref<128x128xbf16, #tpu.memory_space<vmem>>, %arg5: memref<1x128xf32, #tpu.memory_space<vmem>>, %arg6: memref<128x128xbf16, #tpu.memory_space<vmem>>, %arg7: memref<1x128xf32, #tpu.memory_space<vmem>>, %arg8: memref<8x128xf32, #tpu.memory_space<vmem>>) attributes {dimension_semantics = [#tpu.dimension_semantics<parallel>], iteration_bounds = array<i64: 2>, scalar_prefetch = 0 : i64, scratch_operands = 0 : i64, tpu.core_type = #tpu.core_type<tc>, window_params = [{transform_indices = @transform_0, window_bounds = array<i64: 8, 32, 8>}, {pipeline_mode = #tpu.pipeline_mode<synchronous>, transform_indices = @transform_1, window_bounds = array<i64: 8, 128>}, {pipeline_mode = #tpu.pipeline_mode<synchronous>, transform_indices = @transform_2, window_bounds = array<i64: 1, 128>}, {pipeline_mode = #tpu.pipeline_mode<synchronous>, transform_indices = @transform_3, window_bounds = array<i64: 128, 128>}, {pipeline_mode = #tpu.pipeline_mode<synchronous>, transform_indices = @transform_4, window_bounds = array<i64: 1, 128>}, {pipeline_mode = #tpu.pipeline_mode<synchronous>, transform_indices = @transform_5, window_bounds = array<i64: 128, 128>}, {pipeline_mode = #tpu.pipeline_mode<synchronous>, transform_indices = @transform_6, window_bounds = array<i64: 1, 128>}, {transform_indices = @transform_7, window_bounds = array<i64: 8, 128>}]} {
    %c0 = arith.constant 0 : index
    %c0_0 = arith.constant 0 : index
    %c0_1 = arith.constant 0 : index
    %0 = vector.load %arg1[%c0, %c0_0, %c0_1] : memref<8x32x8xbf16, #tpu.memory_space<vmem>>, vector<8x32x8xbf16>
    %1 = vector.extract_strided_slice %0 {offsets = [0, 0, 7], sizes = [8, 32, 1], strides = [1, 1, 1]} : vector<8x32x8xbf16> to vector<8x32x1xbf16>
    %2 = arith.extf %1 : vector<8x32x1xbf16> to vector<8x32x1xf32>
    %3 = vector.shape_cast %0 : vector<8x32x8xbf16> to vector<256x8xbf16>
    %c0_2 = arith.constant 0 : index
    %c0_3 = arith.constant 0 : index
    %4 = vector.load %arg2[%c0_2, %c0_3] : memref<8x128xbf16, #tpu.memory_space<vmem>>, vector<8x128xbf16>
    %cst = arith.constant dense<0.000000e+00> : vector<256x128xf32>
    %5 = tpu.matmul %3, %4, %cst {dimension_numbers = #tpu.dot_dimension_numbers<[1], [0], [0], [1], [0, 0, 1, 1], [], []>} : vector<256x8xbf16>, vector<8x128xbf16>, vector<256x128xf32> -> vector<256x128xf32>
    %c0_4 = arith.constant 0 : index
    %c0_5 = arith.constant 0 : index
    %6 = vector.load %arg3[%c0_4, %c0_5] : memref<1x128xf32, #tpu.memory_space<vmem>>, vector<1x128xf32>
    %7 = vector.broadcast %6 : vector<1x128xf32> to vector<256x128xf32>
    %8 = arith.addf %5, %7 : vector<256x128xf32>
    %cst_6 = arith.constant 0.000000e+00 : f32
    %9 = vector.broadcast %cst_6 : f32 to vector<256x128xf32>
    %10 = arith.maximumf %8, %9 : vector<256x128xf32>
    %11 = arith.truncf %10 : vector<256x128xf32> to vector<256x128xbf16>
    %c0_7 = arith.constant 0 : index
    %c0_8 = arith.constant 0 : index
    %12 = vector.load %arg4[%c0_7, %c0_8] : memref<128x128xbf16, #tpu.memory_space<vmem>>, vector<128x128xbf16>
    %cst_9 = arith.constant dense<0.000000e+00> : vector<256x128xf32>
    %13 = tpu.matmul %11, %12, %cst_9 {dimension_numbers = #tpu.dot_dimension_numbers<[1], [0], [0], [1], [0, 0, 1, 1], [], []>} : vector<256x128xbf16>, vector<128x128xbf16>, vector<256x128xf32> -> vector<256x128xf32>
    %c0_10 = arith.constant 0 : index
    %c0_11 = arith.constant 0 : index
    %14 = vector.load %arg5[%c0_10, %c0_11] : memref<1x128xf32, #tpu.memory_space<vmem>>, vector<1x128xf32>
    %15 = vector.broadcast %14 : vector<1x128xf32> to vector<256x128xf32>
    %16 = arith.addf %13, %15 : vector<256x128xf32>
    %cst_12 = arith.constant 0.000000e+00 : f32
    %17 = vector.broadcast %cst_12 : f32 to vector<256x128xf32>
    %18 = arith.maximumf %16, %17 : vector<256x128xf32>
    %19 = arith.truncf %18 : vector<256x128xf32> to vector<256x128xbf16>
    %c0_13 = arith.constant 0 : index
    %c0_14 = arith.constant 0 : index
    %20 = vector.load %arg6[%c0_13, %c0_14] : memref<128x128xbf16, #tpu.memory_space<vmem>>, vector<128x128xbf16>
    %cst_15 = arith.constant dense<0.000000e+00> : vector<256x128xf32>
    %21 = tpu.matmul %19, %20, %cst_15 {dimension_numbers = #tpu.dot_dimension_numbers<[1], [0], [0], [1], [0, 0, 1, 1], [], []>} : vector<256x128xbf16>, vector<128x128xbf16>, vector<256x128xf32> -> vector<256x128xf32>
    %c0_16 = arith.constant 0 : index
    %c0_17 = arith.constant 0 : index
    %22 = vector.load %arg7[%c0_16, %c0_17] : memref<1x128xf32, #tpu.memory_space<vmem>>, vector<1x128xf32>
    %23 = vector.broadcast %22 : vector<1x128xf32> to vector<256x128xf32>
    %24 = arith.addf %21, %23 : vector<256x128xf32>
    %cst_18 = arith.constant 0.000000e+00 : f32
    %25 = vector.broadcast %cst_18 : f32 to vector<256x128xf32>
    %26 = arith.maximumf %24, %25 : vector<256x128xf32>
    %27 = vector.shape_cast %26 : vector<256x128xf32> to vector<8x32x128xf32>
    %28 = vector.broadcast %2 : vector<8x32x1xf32> to vector<8x32x128xf32>
    %29 = arith.addf %27, %28 : vector<8x32x128xf32>
    %cst_19 = arith.constant dense<0xFF800000> : vector<8x128xf32>
    %30 = vector.multi_reduction <maximumf>, %29, %cst_19 [1] : vector<8x32x128xf32> to vector<8x128xf32>
    %c0_20 = arith.constant 0 : index
    %c0_21 = arith.constant 0 : index
    %31 = vector.load %arg8[%c0_20, %c0_21] : memref<8x128xf32, #tpu.memory_space<vmem>>, vector<8x128xf32>
    tpu.vector_store %arg8[%c0_20, %c0_21], %30 {strides = array<i32>} : memref<8x128xf32, #tpu.memory_space<vmem>>, vector<8x128xf32>,
    return
  }
  func.func @transform_0(%arg0: i32) -> (i32, i32, i32) {
    %c0_i32 = arith.constant 0 : i32
    %c0_i32_0 = arith.constant 0 : i32
    %c0_i32_1 = arith.constant 0 : i32
    return %arg0, %c0_i32, %c0_i32_0 : i32, i32, i32
  }
  func.func @transform_1(%arg0: i32) -> (i32, i32) {
    %c0_i32 = arith.constant 0 : i32
    %c0_i32_0 = arith.constant 0 : i32
    %c0_i32_1 = arith.constant 0 : i32
    return %c0_i32, %c0_i32_0 : i32, i32
  }
  func.func @transform_2(%arg0: i32) -> (i32, i32) {
    %c0_i32 = arith.constant 0 : i32
    %c0_i32_0 = arith.constant 0 : i32
    %c0_i32_1 = arith.constant 0 : i32
    return %c0_i32, %c0_i32_0 : i32, i32
  }
  func.func @transform_3(%arg0: i32) -> (i32, i32) {
    %c0_i32 = arith.constant 0 : i32
    %c0_i32_0 = arith.constant 0 : i32
    %c0_i32_1 = arith.constant 0 : i32
    return %c0_i32, %c0_i32_0 : i32, i32
  }
  func.func @transform_4(%arg0: i32) -> (i32, i32) {
    %c0_i32 = arith.constant 0 : i32
    %c0_i32_0 = arith.constant 0 : i32
    %c0_i32_1 = arith.constant 0 : i32
    return %c0_i32, %c0_i32_0 : i32, i32
  }
  func.func @transform_5(%arg0: i32) -> (i32, i32) {
    %c0_i32 = arith.constant 0 : i32
    %c0_i32_0 = arith.constant 0 : i32
    %c0_i32_1 = arith.constant 0 : i32
    return %c0_i32, %c0_i32_0 : i32, i32
  }
  func.func @transform_6(%arg0: i32) -> (i32, i32) {
    %c0_i32 = arith.constant 0 : i32
    %c0_i32_0 = arith.constant 0 : i32
    %c0_i32_1 = arith.constant 0 : i32
    return %c0_i32, %c0_i32_0 : i32, i32
  }
  func.func @transform_7(%arg0: i32) -> (i32, i32) {
    %c0_i32 = arith.constant 0 : i32
    %c0_i32_0 = arith.constant 0 : i32
    return %arg0, %c0_i32 : i32, i32
  }
}

</mosaic_0001>

<llo_original>
// kernel: tpu_custom_call.1
$region0: #{tpu_custom_call.1}
  #allocation0 [shape = 'u32[]', space=smem, size = 0x4, offset = 0x4, fixed_abs, tag = 'smem constant byte address 0x4 - core index']
  #allocation1 [shape = 'u32[144,128]{1,0:T(1,128)}', space=vmem, size = 0x12000, scoped, tag = 'internal scratch']
  %s0 = inlined_call_operand.vmem [shape: bf16[16,32,8], index: 0, kind: input, shape index: {}]
  %s1 = inlined_call_operand.vmem [shape: bf16[8,128], index: 1, kind: input, shape index: {}]
  %s2 = inlined_call_operand.vmem [shape: f32[1,128], index: 2, kind: input, shape index: {}]
  %s3 = inlined_call_operand.vmem [shape: bf16[128,128], index: 3, kind: input, shape index: {}]
  %s4 = inlined_call_operand.vmem [shape: f32[1,128], index: 4, kind: input, shape index: {}]
  %s5 = inlined_call_operand.vmem [shape: bf16[128,128], index: 5, kind: input, shape index: {}]
  %s6 = inlined_call_operand.vmem [shape: f32[1,128], index: 6, kind: input, shape index: {}]
  %s7 = inlined_call_operand.hbm [shape: f32[16,128], index: 7, kind: output, shape index: {}]
  %s8 = sld [smem:[#allocation0]]
  $region61: #{tpu_custom_call.1} parent=0
    _
  %s10 = ssub.s32 1, %s8
  %s11 = scalar_select 0, %s10, %s8
  $region1: #{tpu_custom_call.1} parent=0
    #allocation2 [shape = 'u8[8192]{0}', space=vmem, size = 0x2000, scoped, tag = 'output window, operand 0']
    #allocation3 [shape = 's32[2]{0}', space=sflag, size = 0x8, scoped, tag = 'scoped memory for tpu_custom_call.1']
    %12 = vsyncpa [#allocation3], 0
    %s13 = scalar_lea.sflag [#allocation3], 1
    %14 = vsyncpa %s13, 0
    loop: start=0, step=1, limit=4
    $region2: #{tpu_custom_call.1} parent=1 // loop_pre_header
      _
    $region3: #{tpu_custom_call.1} parent=1 // loop_header
      %s16 = sphi 0, %s20
      %p17 = scmp.ge.s32.totalorder %s16, 4
      %s26 = sphi 0, %s28
      %s29 = sphi 0, %s26
      %s30 = sphi 0, %s29
      %s46 = sphi 0, %s30
      %s50 = sphi 0, %s50
      %s52 = sphi 0, %s50
      %s53 = sphi 0, %s52
      %s67 = sphi 0, %s53
      %s71 = sphi 0, %s71
      %s73 = sphi 0, %s71
      %s74 = sphi 0, %s73
      %s88 = sphi 0, %s74
      %s92 = sphi 0, %s92
      %s94 = sphi 0, %s92
      %s95 = sphi 0, %s94
      %s109 = sphi 0, %s95
      %s113 = sphi 0, %s113
      %s115 = sphi 0, %s113
      %s116 = sphi 0, %s115
      %s130 = sphi 0, %s116
      %s134 = sphi 0, %s134
      %s136 = sphi 0, %s134
      %s137 = sphi 0, %s136
      %s151 = sphi 0, %s137
      %s155 = sphi 0, %s155
      %s157 = sphi 0, %s155
      %s158 = sphi 0, %s157
      %s172 = sphi 0, %s158
      %s178 = sphi 0, %s180
      %s181 = sphi 0, %s178
      %s182 = sphi 0, %s181
      %s198 = sphi 0, %s182
    $region4: #{tpu_custom_call.1} parent=1 // loop_header_branch
      %19 = sbr.rel (%p17) target = $region8
    $region5: #{tpu_custom_call.1} parent=1 // loop_body
      %s21 = ssub.s32 %s16, 1
      %s22 = ssub.s32 %s16, 2
      %s23 = sadd.s32 %s16, 1
      %s24 = ssub.s32 %s16, %s23
      %p25 = scmp.eq.s32.totalorder %s24, 0
      %s27 = sadd.s32 %s26, 1
      %s28 = scalar_select %p25, %s26, %s27
      %p31 = pneg %p25
      %p32 = scmp.eq.s32.totalorder %s16, 1
      %p33 = por %p31, %p32
      %p34 = scmp.ne.s32.totalorder %s26, %s29
      %p35 = scmp.eq.s32.totalorder %s16, 0
      %p36 = por %p34, %p35
      %p37 = scmp.ne.s32.totalorder %s26, %s29
      %p38 = scmp.eq.s32.totalorder %s21, 1
      %p39 = por %p37, %p38
      %p40 = scmp.ne.s32.totalorder %s29, %s30
      %p41 = scmp.eq.s32.totalorder %s21, 0
      %p42 = por %p40, %p41
      %p43 = scmp.ne.s32.totalorder %s29, %s30
      %p44 = scmp.eq.s32.totalorder %s22, 1
      %p45 = por %p43, %p44
      %p47 = scmp.ne.s32.totalorder %s30, %s46
      %p48 = scmp.eq.s32.totalorder %s22, 0
      %p49 = por %p47, %p48
      %s51 = sadd.s32 %s50, 1
      %p54 = scmp.eq.s32.totalorder %s16, 1
      %p55 = scmp.ne.s32.totalorder %s50, %s52
      %p56 = scmp.eq.s32.totalorder %s16, 0
      %p57 = por %p55, %p56
      %p58 = scmp.ne.s32.totalorder %s50, %s52
      %p59 = scmp.eq.s32.totalorder %s21, 1
      %p60 = por %p58, %p59
      %p61 = scmp.ne.s32.totalorder %s52, %s53
      %p62 = scmp.eq.s32.totalorder %s21, 0
      %p63 = por %p61, %p62
      %p64 = scmp.ne.s32.totalorder %s52, %s53
      %p65 = scmp.eq.s32.totalorder %s22, 1
      %p66 = por %p64, %p65
      %p68 = scmp.ne.s32.totalorder %s53, %s67
      %p69 = scmp.eq.s32.totalorder %s22, 0
      %p70 = por %p68, %p69
      %s72 = sadd.s32 %s71, 1
      %p75 = scmp.eq.s32.totalorder %s16, 1
      %p76 = scmp.ne.s32.totalorder %s71, %s73
      %p77 = scmp.eq.s32.totalorder %s16, 0
      %p78 = por %p76, %p77
      %p79 = scmp.ne.s32.totalorder %s71, %s73
      %p80 = scmp.eq.s32.totalorder %s21, 1
      %p81 = por %p79, %p80
      %p82 = scmp.ne.s32.totalorder %s73, %s74
      %p83 = scmp.eq.s32.totalorder %s21, 0
      %p84 = por %p82, %p83
      %p85 = scmp.ne.s32.totalorder %s73, %s74
      %p86 = scmp.eq.s32.totalorder %s22, 1
      %p87 = por %p85, %p86
      %p89 = scmp.ne.s32.totalorder %s74, %s88
      %p90 = scmp.eq.s32.totalorder %s22, 0
      %p91 = por %p89, %p90
      %s93 = sadd.s32 %s92, 1
      %p96 = scmp.eq.s32.totalorder %s16, 1
      %p97 = scmp.ne.s32.totalorder %s92, %s94
      %p98 = scmp.eq.s32.totalorder %s16, 0
      %p99 = por %p97, %p98
      %p100 = scmp.ne.s32.totalorder %s92, %s94
      %p101 = scmp.eq.s32.totalorder %s21, 1
      %p102 = por %p100, %p101
      %p103 = scmp.ne.s32.totalorder %s94, %s95
      %p104 = scmp.eq.s32.totalorder %s21, 0
      %p105 = por %p103, %p104
      %p106 = scmp.ne.s32.totalorder %s94, %s95
      %p107 = scmp.eq.s32.totalorder %s22, 1
      %p108 = por %p106, %p107
      %p110 = scmp.ne.s32.totalorder %s95, %s109
      %p111 = scmp.eq.s32.totalorder %s22, 0
      %p112 = por %p110, %p111
      %s114 = sadd.s32 %s113, 1
      %p117 = scmp.eq.s32.totalorder %s16, 1
      %p118 = scmp.ne.s32.totalorder %s113, %s115
      %p119 = scmp.eq.s32.totalorder %s16, 0
      %p120 = por %p118, %p119
      %p121 = scmp.ne.s32.totalorder %s113, %s115
      %p122 = scmp.eq.s32.totalorder %s21, 1
      %p123 = por %p121, %p122
      %p124 = scmp.ne.s32.totalorder %s115, %s116
      %p125 = scmp.eq.s32.totalorder %s21, 0
      %p126 = por %p124, %p125
      %p127 = scmp.ne.s32.totalorder %s115, %s116
      %p128 = scmp.eq.s32.totalorder %s22, 1
      %p129 = por %p127, %p128
      %p131 = scmp.ne.s32.totalorder %s116, %s130
      %p132 = scmp.eq.s32.totalorder %s22, 0
      %p133 = por %p131, %p132
      %s135 = sadd.s32 %s134, 1
      %p138 = scmp.eq.s32.totalorder %s16, 1
      %p139 = scmp.ne.s32.totalorder %s134, %s136
      %p140 = scmp.eq.s32.totalorder %s16, 0
      %p141 = por %p139, %p140
      %p142 = scmp.ne.s32.totalorder %s134, %s136
      %p143 = scmp.eq.s32.totalorder %s21, 1
      %p144 = por %p142, %p143
      %p145 = scmp.ne.s32.totalorder %s136, %s137
      %p146 = scmp.eq.s32.totalorder %s21, 0
      %p147 = por %p145, %p146
      %p148 = scmp.ne.s32.totalorder %s136, %s137
      %p149 = scmp.eq.s32.totalorder %s22, 1
      %p150 = por %p148, %p149
      %p152 = scmp.ne.s32.totalorder %s137, %s151
      %p153 = scmp.eq.s32.totalorder %s22, 0
      %p154 = por %p152, %p153
      %s156 = sadd.s32 %s155, 1
      %p159 = scmp.eq.s32.totalorder %s16, 1
      %p160 = scmp.ne.s32.totalorder %s155, %s157
      %p161 = scmp.eq.s32.totalorder %s16, 0
      %p162 = por %p160, %p161
      %p163 = scmp.ne.s32.totalorder %s155, %s157
      %p164 = scmp.eq.s32.totalorder %s21, 1
      %p165 = por %p163, %p164
      %p166 = scmp.ne.s32.totalorder %s157, %s158
      %p167 = scmp.eq.s32.totalorder %s21, 0
      %p168 = por %p166, %p167
      %p169 = scmp.ne.s32.totalorder %s157, %s158
      %p170 = scmp.eq.s32.totalorder %s22, 1
      %p171 = por %p169, %p170
      %p173 = scmp.ne.s32.totalorder %s158, %s172
      %p174 = scmp.eq.s32.totalorder %s22, 0
      %p175 = por %p173, %p174
      %s176 = ssub.s32 %s16, %s23
      %p177 = scmp.eq.s32.totalorder %s176, 0
      %s179 = sadd.s32 %s178, 1
      %s180 = scalar_select %p177, %s178, %s179
      %p183 = pneg %p177
      %p184 = scmp.eq.s32.totalorder %s16, 1
      %p185 = por %p183, %p184
      %p186 = scmp.ne.s32.totalorder %s178, %s181
      %p187 = scmp.eq.s32.totalorder %s16, 0
      %p188 = por %p186, %p187
      %p189 = scmp.ne.s32.totalorder %s178, %s181
      %p190 = scmp.eq.s32.totalorder %s21, 1
      %p191 = por %p189, %p190
      %p192 = scmp.ne.s32.totalorder %s181, %s182
      %p193 = scmp.eq.s32.totalorder %s21, 0
      %p194 = por %p192, %p193
      %p195 = scmp.ne.s32.totalorder %s181, %s182
      %p196 = scmp.eq.s32.totalorder %s22, 1
      %p197 = por %p195, %p196
      %p199 = scmp.ne.s32.totalorder %s182, %s198
      %p200 = scmp.eq.s32.totalorder %s22, 0
      %p201 = por %p199, %p200
      %p202 = scmp.le.s32.totalorder 1, %s16
      %p203 = scmp.lt.s32.totalorder %s16, 3
      %p204 = pnand %p202, %p203
      %p205 = pneg %p204
      // Predicated region
      $region9: #{tpu_custom_call.1} parent=5 // pred_check
        _
      $region10: #{tpu_custom_call.1} parent=5 // pred_check_branch
        %207 = sbr.rel (%p204) target = $region12
      $region11: #{tpu_custom_call.1} parent=5 // pred_region
        %s208 = ssub.s32 %s16, 1
        // Predicated region
        $region13: #{tpu_custom_call.1} parent=11 // pred_check
          %p209 = pneg %p63
        $region14: #{tpu_custom_call.1} parent=11 // pred_check_branch
          %211 = sbr.rel (%p209) target = $region16
        $region15: #{tpu_custom_call.1} parent=11 // pred_region
          _
        $region16: #{tpu_custom_call.1} parent=11 // pred_fallthru
          _
        // Predicated region
        $region17: #{tpu_custom_call.1} parent=11 // pred_check
          %p212 = pneg %p84
        $region18: #{tpu_custom_call.1} parent=11 // pred_check_branch
          %214 = sbr.rel (%p212) target = $region20
        $region19: #{tpu_custom_call.1} parent=11 // pred_region
          _
        $region20: #{tpu_custom_call.1} parent=11 // pred_fallthru
          _
        // Predicated region
        $region21: #{tpu_custom_call.1} parent=11 // pred_check
          %p215 = pneg %p105
        $region22: #{tpu_custom_call.1} parent=11 // pred_check_branch
          %217 = sbr.rel (%p215) target = $region24
        $region23: #{tpu_custom_call.1} parent=11 // pred_region
          _
        $region24: #{tpu_custom_call.1} parent=11 // pred_fallthru
          _
        // Predicated region
        $region25: #{tpu_custom_call.1} parent=11 // pred_check
          %p218 = pneg %p126
        $region26: #{tpu_custom_call.1} parent=11 // pred_check_branch
          %220 = sbr.rel (%p218) target = $region28
        $region27: #{tpu_custom_call.1} parent=11 // pred_region
          _
        $region28: #{tpu_custom_call.1} parent=11 // pred_fallthru
          _
        // Predicated region
        $region29: #{tpu_custom_call.1} parent=11 // pred_check
          %p221 = pneg %p147
        $region30: #{tpu_custom_call.1} parent=11 // pred_check_branch
          %223 = sbr.rel (%p221) target = $region32
        $region31: #{tpu_custom_call.1} parent=11 // pred_region
          _
        $region32: #{tpu_custom_call.1} parent=11 // pred_fallthru
          _
        // Predicated region
        $region33: #{tpu_custom_call.1} parent=11 // pred_check
          %p224 = pneg %p168
        $region34: #{tpu_custom_call.1} parent=11 // pred_check_branch
          %226 = sbr.rel (%p224) target = $region36
        $region35: #{tpu_custom_call.1} parent=11 // pred_region
          _
        $region36: #{tpu_custom_call.1} parent=11 // pred_fallthru
          _
      $region12: #{tpu_custom_call.1} parent=5 // pred_fallthru
        _
      %p227 = scmp.lt.s32.totalorder %s16, 2
      // Predicated region
      $region37: #{tpu_custom_call.1} parent=5 // pred_check
        %p228 = pneg %p227
      $region38: #{tpu_custom_call.1} parent=5 // pred_check_branch
        %230 = sbr.rel (%p228) target = $region40
      $region39: #{tpu_custom_call.1} parent=5 // pred_region
        // Predicated region
        $region41: #{tpu_custom_call.1} parent=39 // pred_check
          %p231 = pneg %p36
        $region42: #{tpu_custom_call.1} parent=39 // pred_check_branch
          %233 = sbr.rel (%p231) target = $region44
        $region43: #{tpu_custom_call.1} parent=39 // pred_region
          %s234 = smul.u32 8, %s16
          %p235 = scmp.lt.s32.totalorder %s234, 15
          %s236 = scalar_select %p235, %s234, 15
          %s237 = smul.addr %s236, 4
          %s238 = smul.addr %s237, 4
          %s239 = scalar_lea.vmem %s0, %s238
          %s240 = smul.u32 8, %s16
        $region44: #{tpu_custom_call.1} parent=39 // pred_fallthru
          _
      $region40: #{tpu_custom_call.1} parent=5 // pred_fallthru
        _
      %p241 = scmp.le.s32.totalorder 1, %s16
      %p242 = scmp.lt.s32.totalorder %s16, 3
      %p243 = pnand %p241, %p242
      %p244 = pneg %p243
      // Predicated region
      $region45: #{tpu_custom_call.1} parent=5 // pred_check
        _
      $region46: #{tpu_custom_call.1} parent=5 // pred_check_branch
        %246 = sbr.rel (%p243) target = $region48
      $region47: #{tpu_custom_call.1} parent=5 // pred_region
        %s247 = ssub.s32 %s16, 1
        %s248 = smul.u32 8, %s21
        %p249 = scmp.lt.s32.totalorder %s248, 15
        %s250 = scalar_select %p249, %s248, 15
        %s251 = smul.addr %s250, 4
        %s252 = smul.addr %s251, 4
        %s253 = scalar_lea.vmem %s0, %s252
        %p254 = pneg %p42
        %p255 = pneg %p39
        %p256 = pneg %p63
        %p257 = pneg %p60
        %p258 = pneg %p84
        %p259 = pneg %p81
        %p260 = pneg %p105
        %p261 = pneg %p102
        %p262 = pneg %p126
        %p263 = pneg %p123
        %p264 = pneg %p147
        %p265 = pneg %p144
        %p266 = pneg %p168
        %p267 = pneg %p165
        %p268 = pneg %p194
        %p269 = pneg %p191
        %s270 = sand.u32 %s181, 1
        %s271 = scalar_lea.sflag [#allocation3], %s270
        %s272 = sand.u32 %s181, 1
        %s273 = smul.addr %s272, 8
        %s274 = scalar_lea.vmem [#allocation2], %s273
        %s275 = smul.u32 8, %s21
        %p276 = scmp.lt.s32.totalorder %s275, 15
        %s277 = scalar_select %p276, %s275, 15
        %s278 = smul.addr %s277, 4
        %s279 = smul.addr %s278, 4
        %s280 = scalar_lea.vmem %s0, %s279
        %s281 = smul.u32 8, %s21
        %v283 = vld [vmem:[%s280] sm:$0xf]
        %v284 = vld [vmem:[%s280 + $0x4] sm:$0xf]
        %v285 = vld [vmem:[%s280 + $0x8] sm:$0xf]
        %v286 = vld [vmem:[%s280 + $0xc] sm:$0xf]
        %v287 = vld [vmem:[%s280 + $0x10] sm:$0xf]
        %v288 = vld [vmem:[%s280 + $0x14] sm:$0xf]
        %v289 = vld [vmem:[%s280 + $0x18] sm:$0xf]
        %v290 = vld [vmem:[%s280 + $0x1c] sm:$0xf]
        %v291 = vld [vmem:[%s280 + $0x20] sm:$0xf]
        %v292 = vld [vmem:[%s280 + $0x24] sm:$0xf]
        %v293 = vld [vmem:[%s280 + $0x28] sm:$0xf]
        %v294 = vld [vmem:[%s280 + $0x2c] sm:$0xf]
        %v295 = vld [vmem:[%s280 + $0x30] sm:$0xf]
        %v296 = vld [vmem:[%s280 + $0x34] sm:$0xf]
        %v297 = vld [vmem:[%s280 + $0x38] sm:$0xf]
        %v298 = vld [vmem:[%s280 + $0x3c] sm:$0xf]
        %v299 = vld [vmem:[%s280 + $0x40] sm:$0xf]
        %v300 = vld [vmem:[%s280 + $0x44] sm:$0xf]
        %v301 = vld [vmem:[%s280 + $0x48] sm:$0xf]
        %v302 = vld [vmem:[%s280 + $0x4c] sm:$0xf]
        %v303 = vld [vmem:[%s280 + $0x50] sm:$0xf]
        %v304 = vld [vmem:[%s280 + $0x54] sm:$0xf]
        %v305 = vld [vmem:[%s280 + $0x58] sm:$0xf]
        %v306 = vld [vmem:[%s280 + $0x5c] sm:$0xf]
        %v307 = vld [vmem:[%s280 + $0x60] sm:$0xf]
        %v308 = vld [vmem:[%s280 + $0x64] sm:$0xf]
        %v309 = vld [vmem:[%s280 + $0x68] sm:$0xf]
        %v310 = vld [vmem:[%s280 + $0x6c] sm:$0xf]
        %v311 = vld [vmem:[%s280 + $0x70] sm:$0xf]
        %v312 = vld [vmem:[%s280 + $0x74] sm:$0xf]
        %v313 = vld [vmem:[%s280 + $0x78] sm:$0xf]
        %v314 = vld [vmem:[%s280 + $0x7c] sm:$0xf]
        %v315 = vunpack.c.l.bf16 %v283
        %v316 = vunpack.c.l.bf16 %v284
        %v317 = vunpack.c.l.bf16 %v285
        %v318 = vunpack.c.l.bf16 %v286
        %v319 = vunpack.c.l.bf16 %v287
        %v320 = vunpack.c.l.bf16 %v288
        %v321 = vunpack.c.l.bf16 %v289
        %v322 = vunpack.c.l.bf16 %v290
        %v323 = vunpack.c.l.bf16 %v291
        %v324 = vunpack.c.l.bf16 %v292
        %v325 = vunpack.c.l.bf16 %v293
        %v326 = vunpack.c.l.bf16 %v294
        %v327 = vunpack.c.l.bf16 %v295
        %v328 = vunpack.c.l.bf16 %v296
        %v329 = vunpack.c.l.bf16 %v297
        %v330 = vunpack.c.l.bf16 %v298
        %v331 = vunpack.c.l.bf16 %v299
        %v332 = vunpack.c.l.bf16 %v300
        %v333 = vunpack.c.l.bf16 %v301
        %v334 = vunpack.c.l.bf16 %v302
        %v335 = vunpack.c.l.bf16 %v303
        %v336 = vunpack.c.l.bf16 %v304
        %v337 = vunpack.c.l.bf16 %v305
        %v338 = vunpack.c.l.bf16 %v306
        %v339 = vunpack.c.l.bf16 %v307
        %v340 = vunpack.c.l.bf16 %v308
        %v341 = vunpack.c.l.bf16 %v309
        %v342 = vunpack.c.l.bf16 %v310
        %v343 = vunpack.c.l.bf16 %v311
        %v344 = vunpack.c.l.bf16 %v312
        %v345 = vunpack.c.l.bf16 %v313
        %v346 = vunpack.c.l.bf16 %v314
        %v347 = vld [vmem:[%s1] sm:$0xf]
        %v348 = vld [vmem:[%s2] sm:$0x1]
        %v350 = vlaneseq
        %v351 = vshrl.u32 %v350, 7
        %v352 = vsub.s32 0, %v351
        %v353 = vrot.slane %v348, %v352
        %v387 = vunpack.c.l.b16 %v283
        %v388 = vunpack.c.l.b16 %v284
        %v389 = vunpack.c.l.b16 %v285
        %v390 = vunpack.c.l.b16 %v286
        %v391 = vunpack.c.l.b16 %v287
        %v392 = vunpack.c.l.b16 %v288
        %v393 = vunpack.c.l.b16 %v289
        %v394 = vunpack.c.l.b16 %v290
        %v395 = vunpack.c.l.b16 %v291
        %v396 = vunpack.c.l.b16 %v292
        %v397 = vunpack.c.l.b16 %v293
        %v398 = vunpack.c.l.b16 %v294
        %v399 = vunpack.c.l.b16 %v295
        %v400 = vunpack.c.l.b16 %v296
        %v401 = vunpack.c.l.b16 %v297
        %v402 = vunpack.c.l.b16 %v298
        %v403 = vunpack.c.l.b16 %v299
        %v404 = vunpack.c.l.b16 %v300
        %v405 = vunpack.c.l.b16 %v301
        %v406 = vunpack.c.l.b16 %v302
        %v407 = vunpack.c.l.b16 %v303
        %v408 = vunpack.c.l.b16 %v304
        %v409 = vunpack.c.l.b16 %v305
        %v410 = vunpack.c.l.b16 %v306
        %v411 = vunpack.c.l.b16 %v307
        %v412 = vunpack.c.l.b16 %v308
        %v413 = vunpack.c.l.b16 %v309
        %v414 = vunpack.c.l.b16 %v310
        %v415 = vunpack.c.l.b16 %v311
        %v416 = vunpack.c.l.b16 %v312
        %v417 = vunpack.c.l.b16 %v313
        %v418 = vunpack.c.l.b16 %v314
        %v419 = vpack.c.b16 %v388, %v387
        %v420 = vpack.c.b16 %v390, %v389
        %v421 = vpack.c.b16 %v392, %v391
        %v422 = vpack.c.b16 %v394, %v393
        %v423 = vpack.c.b16 %v396, %v395
        %v424 = vpack.c.b16 %v398, %v397
        %v425 = vpack.c.b16 %v400, %v399
        %v426 = vpack.c.b16 %v402, %v401
        %v427 = vpack.c.b16 %v404, %v403
        %v428 = vpack.c.b16 %v406, %v405
        %v429 = vpack.c.b16 %v408, %v407
        %v430 = vpack.c.b16 %v410, %v409
        %v431 = vpack.c.b16 %v412, %v411
        %v432 = vpack.c.b16 %v414, %v413
        %v433 = vpack.c.b16 %v416, %v415
        %v434 = vpack.c.b16 %v418, %v417
        %vm435 = vcmask 64512
        %v437 = vsel %vm435, %v419, 0
        %v440 = vsel %vm435, %v420, 0
        %v443 = vsel %vm435, %v421, 0
        %v446 = vsel %vm435, %v422, 0
        %v449 = vsel %vm435, %v423, 0
        %v452 = vsel %vm435, %v424, 0
        %v455 = vsel %vm435, %v425, 0
        %v458 = vsel %vm435, %v426, 0
        %v461 = vsel %vm435, %v427, 0
        %v464 = vsel %vm435, %v428, 0
        %v467 = vsel %vm435, %v429, 0
        %v470 = vsel %vm435, %v430, 0
        %v473 = vsel %vm435, %v431, 0
        %v476 = vsel %vm435, %v432, 0
        %v479 = vsel %vm435, %v433, 0
        %v482 = vsel %vm435, %v434, 0
        %vm484 = vcmask 1043456
        %v486 = vsel %vm484, %v347, 0
        %488 = vmatprep.subr.bf16.mxu0 0
        %489 = vmatpush1.bf16.msra.mxu0 %v486
        %490 = vmatprep.subr.bf16.mxu0 0
        %491 = vmatpush1.bf16.msra.mxu0 0
        %492 = vmatprep.subr.bf16.mxu0 0
        %493 = vmatpush1.bf16.msra.mxu0 0
        %494 = vmatprep.subr.bf16.mxu0 0
        %495 = vmatpush1.bf16.msra.mxu0 0
        %496 = vmatprep.subr.bf16.mxu0 0
        %497 = vmatpush1.bf16.msra.mxu0 0
        %498 = vmatprep.subr.bf16.mxu0 0
        %499 = vmatpush1.bf16.msra.mxu0 0
        %500 = vmatprep.subr.bf16.mxu0 0
        %501 = vmatpush1.bf16.msra.mxu0 0
        %502 = vmatprep.subr.bf16.mxu0 0
        %503 = vmatpush1.bf16.msra.mxu0 0
        %504 = vmatprep.subr.bf16.mxu0 0
        %505 = vmatpush1.bf16.msra.mxu0 0
        %506 = vmatprep.subr.bf16.mxu0 0
        %507 = vmatpush1.bf16.msra.mxu0 0
        %508 = vmatprep.subr.bf16.mxu0 0
        %509 = vmatpush1.bf16.msra.mxu0 0
        %510 = vmatprep.subr.bf16.mxu0 0
        %511 = vmatpush1.bf16.msra.mxu0 0
        %512 = vmatprep.subr.bf16.mxu0 0
        %513 = vmatpush1.bf16.msra.mxu0 0
        %514 = vmatprep.subr.bf16.mxu0 0
        %515 = vmatpush1.bf16.msra.mxu0 0
        %516 = vmatprep.subr.bf16.mxu0 0
        %517 = vmatpush1.bf16.msra.mxu0 0
        %518 = vmatprep.subr.bf16.mxu0 0
        %519 = vmatpush1.bf16.msra.mxu0 0
        %520 = vmatprep.mubr.bf16.mxu0 0
        %521 = vmatmul.mubr.bf16.gmra.mrb[0].mxu0 %v437
        %v522 = vpop.f32.mrb[0].mxu0
        %v523 = vadd.f32 %v353, %v522
        %v524 = vpop.f32.mrb[0].mxu0
        %v525 = vpop.f32.mrb[0].mxu0
        %v526 = vadd.f32 %v353, %v525
        %v527 = vpop.f32.mrb[0].mxu0
        %528 = vmatprep.mubr.bf16.mxu0 0
        %529 = vmatmul.mubr.bf16.gmra.mrb[0].mxu0 %v440
        %v530 = vpop.f32.mrb[0].mxu0
        %v531 = vadd.f32 %v353, %v530
        %v532 = vpop.f32.mrb[0].mxu0
        %v533 = vpop.f32.mrb[0].mxu0
        %v534 = vadd.f32 %v353, %v533
        %v535 = vpop.f32.mrb[0].mxu0
        %536 = vmatprep.mubr.bf16.mxu0 0
        %537 = vmatmul.mubr.bf16.gmra.mrb[0].mxu0 %v443
        %v538 = vpop.f32.mrb[0].mxu0
        %v539 = vadd.f32 %v353, %v538
        %v540 = vpop.f32.mrb[0].mxu0
        %v541 = vpop.f32.mrb[0].mxu0
        %v542 = vadd.f32 %v353, %v541
        %v543 = vpop.f32.mrb[0].mxu0
        %544 = vmatprep.mubr.bf16.mxu0 0
        %545 = vmatmul.mubr.bf16.gmra.mrb[0].mxu0 %v446
        %v546 = vpop.f32.mrb[0].mxu0
        %v547 = vadd.f32 %v353, %v546
        %v548 = vpop.f32.mrb[0].mxu0
        %v549 = vpop.f32.mrb[0].mxu0
        %v550 = vadd.f32 %v353, %v549
        %v551 = vpop.f32.mrb[0].mxu0
        %552 = vmatprep.mubr.bf16.mxu0 0
        %553 = vmatmul.mubr.bf16.gmra.mrb[0].mxu0 %v449
        %v554 = vpop.f32.mrb[0].mxu0
        %v555 = vadd.f32 %v353, %v554
        %v556 = vpop.f32.mrb[0].mxu0
        %v557 = vpop.f32.mrb[0].mxu0
        %v558 = vadd.f32 %v353, %v557
        %v559 = vpop.f32.mrb[0].mxu0
        %560 = vmatprep.mubr.bf16.mxu0 0
        %561 = vmatmul.mubr.bf16.gmra.mrb[0].mxu0 %v452
        %v562 = vpop.f32.mrb[0].mxu0
        %v563 = vadd.f32 %v353, %v562
        %v564 = vpop.f32.mrb[0].mxu0
        %v565 = vpop.f32.mrb[0].mxu0
        %v566 = vadd.f32 %v353, %v565
        %v567 = vpop.f32.mrb[0].mxu0
        %568 = vmatprep.mubr.bf16.mxu0 0
        %569 = vmatmul.mubr.bf16.gmra.mrb[0].mxu0 %v455
        %v570 = vpop.f32.mrb[0].mxu0
        %v571 = vadd.f32 %v353, %v570
        %v572 = vpop.f32.mrb[0].mxu0
        %v573 = vpop.f32.mrb[0].mxu0
        %v574 = vadd.f32 %v353, %v573
        %v575 = vpop.f32.mrb[0].mxu0
        %576 = vmatprep.mubr.bf16.mxu0 0
        %577 = vmatmul.mubr.bf16.gmra.mrb[0].mxu0 %v458
        %v578 = vpop.f32.mrb[0].mxu0
        %v579 = vadd.f32 %v353, %v578
        %v580 = vpop.f32.mrb[0].mxu0
        %v581 = vpop.f32.mrb[0].mxu0
        %v582 = vadd.f32 %v353, %v581
        %v583 = vpop.f32.mrb[0].mxu0
        %584 = vmatprep.mubr.bf16.mxu0 0
        %585 = vmatmul.mubr.bf16.gmra.mrb[0].mxu0 %v461
        %v586 = vpop.f32.mrb[0].mxu0
        %v587 = vadd.f32 %v353, %v586
        %v588 = vpop.f32.mrb[0].mxu0
        %v589 = vpop.f32.mrb[0].mxu0
        %v590 = vadd.f32 %v353, %v589
        %v591 = vpop.f32.mrb[0].mxu0
        %592 = vmatprep.mubr.bf16.mxu0 0
        %593 = vmatmul.mubr.bf16.gmra.mrb[0].mxu0 %v464
        %v594 = vpop.f32.mrb[0].mxu0
        %v595 = vadd.f32 %v353, %v594
        %v596 = vpop.f32.mrb[0].mxu0
        %v597 = vpop.f32.mrb[0].mxu0
        %v598 = vadd.f32 %v353, %v597
        %v599 = vpop.f32.mrb[0].mxu0
        %600 = vmatprep.mubr.bf16.mxu0 0
        %601 = vmatmul.mubr.bf16.gmra.mrb[0].mxu0 %v467
        %v602 = vpop.f32.mrb[0].mxu0
        %v603 = vadd.f32 %v353, %v602
        %v604 = vpop.f32.mrb[0].mxu0
        %v605 = vpop.f32.mrb[0].mxu0
        %v606 = vadd.f32 %v353, %v605
        %v607 = vpop.f32.mrb[0].mxu0
        %608 = vmatprep.mubr.bf16.mxu0 0
        %609 = vmatmul.mubr.bf16.gmra.mrb[0].mxu0 %v470
        %v610 = vpop.f32.mrb[0].mxu0
        %v611 = vadd.f32 %v353, %v610
        %v612 = vpop.f32.mrb[0].mxu0
        %v613 = vpop.f32.mrb[0].mxu0
        %v614 = vadd.f32 %v353, %v613
        %v615 = vpop.f32.mrb[0].mxu0
        %616 = vmatprep.mubr.bf16.mxu0 0
        %617 = vmatmul.mubr.bf16.gmra.mrb[0].mxu0 %v473
        %v618 = vpop.f32.mrb[0].mxu0
        %v619 = vadd.f32 %v353, %v618
        %v620 = vpop.f32.mrb[0].mxu0
        %v621 = vpop.f32.mrb[0].mxu0
        %v622 = vadd.f32 %v353, %v621
        %v623 = vpop.f32.mrb[0].mxu0
        %624 = vmatprep.mubr.bf16.mxu0 0
        %625 = vmatmul.mubr.bf16.gmra.mrb[0].mxu0 %v476
        %v626 = vpop.f32.mrb[0].mxu0
        %v627 = vadd.f32 %v353, %v626
        %v628 = vpop.f32.mrb[0].mxu0
        %v629 = vpop.f32.mrb[0].mxu0
        %v630 = vadd.f32 %v353, %v629
        %v631 = vpop.f32.mrb[0].mxu0
        %632 = vmatprep.mubr.bf16.mxu0 0
        %633 = vmatmul.mubr.bf16.gmra.mrb[0].mxu0 %v479
        %v634 = vpop.f32.mrb[0].mxu0
        %v635 = vadd.f32 %v353, %v634
        %v636 = vpop.f32.mrb[0].mxu0
        %v637 = vpop.f32.mrb[0].mxu0
        %v638 = vadd.f32 %v353, %v637
        %v639 = vpop.f32.mrb[0].mxu0
        %640 = vmatprep.mubr.bf16.mxu0 0
        %641 = vmatmul.mubr.bf16.gmra.mrb[0].mxu0 %v482
        %v642 = vpop.f32.mrb[0].mxu0
        %v643 = vadd.f32 %v353, %v642
        %v644 = vpop.f32.mrb[0].mxu0
        %v645 = vpop.f32.mrb[0].mxu0
        %v646 = vadd.f32 %v353, %v645
        %v647 = vpop.f32.mrb[0].mxu0
        %648 = vdwg.mxu0
        %v649 = vmax.f32 %v523, 0.0
        %v650 = vmax.f32 %v526, 0.0
        %v651 = vmax.f32 %v531, 0.0
        %v652 = vmax.f32 %v534, 0.0
        %v653 = vmax.f32 %v539, 0.0
        %v654 = vmax.f32 %v542, 0.0
        %v655 = vmax.f32 %v547, 0.0
        %v656 = vmax.f32 %v550, 0.0
        %v657 = vmax.f32 %v555, 0.0
        %v658 = vmax.f32 %v558, 0.0
        %v659 = vmax.f32 %v563, 0.0
        %v660 = vmax.f32 %v566, 0.0
        %v661 = vmax.f32 %v571, 0.0
        %v662 = vmax.f32 %v574, 0.0
        %v663 = vmax.f32 %v579, 0.0
        %v664 = vmax.f32 %v582, 0.0
        %v665 = vmax.f32 %v587, 0.0
        %v666 = vmax.f32 %v590, 0.0
        %v667 = vmax.f32 %v595, 0.0
        %v668 = vmax.f32 %v598, 0.0
        %v669 = vmax.f32 %v603, 0.0
        %v670 = vmax.f32 %v606, 0.0
        %v671 = vmax.f32 %v611, 0.0
        %v672 = vmax.f32 %v614, 0.0
        %v673 = vmax.f32 %v619, 0.0
        %v674 = vmax.f32 %v622, 0.0
        %v675 = vmax.f32 %v627, 0.0
        %v676 = vmax.f32 %v630, 0.0
        %v677 = vmax.f32 %v635, 0.0
        %v678 = vmax.f32 %v638, 0.0
        %v679 = vmax.f32 %v643, 0.0
        %v680 = vmax.f32 %v646, 0.0
        %v681 = vpack.c.bf16 %v650, %v649
        %v682 = vpack.c.bf16 %v652, %v651
        %v683 = vpack.c.bf16 %v654, %v653
        %v684 = vpack.c.bf16 %v656, %v655
        %v685 = vpack.c.bf16 %v658, %v657
        %v686 = vpack.c.bf16 %v660, %v659
        %v687 = vpack.c.bf16 %v662, %v661
        %v688 = vpack.c.bf16 %v664, %v663
        %v689 = vpack.c.bf16 %v666, %v665
        %v690 = vpack.c.bf16 %v668, %v667
        %v691 = vpack.c.bf16 %v670, %v669
        %v692 = vpack.c.bf16 %v672, %v671
        %v693 = vpack.c.bf16 %v674, %v673
        %v694 = vpack.c.bf16 %v676, %v675
        %v695 = vpack.c.bf16 %v678, %v677
        %v696 = vpack.c.bf16 %v680, %v679
        %v697 = vld [vmem:[%s3] sm:$0xf]
        %v698 = vld [vmem:[%s3 + $0x4] sm:$0xf]
        %v699 = vld [vmem:[%s3 + $0x8] sm:$0xf]
        %v700 = vld [vmem:[%s3 + $0xc] sm:$0xf]
        %v701 = vld [vmem:[%s3 + $0x10] sm:$0xf]
        %v702 = vld [vmem:[%s3 + $0x14] sm:$0xf]
        %v703 = vld [vmem:[%s3 + $0x18] sm:$0xf]
        %v704 = vld [vmem:[%s3 + $0x1c] sm:$0xf]
        %v705 = vld [vmem:[%s3 + $0x20] sm:$0xf]
        %v706 = vld [vmem:[%s3 + $0x24] sm:$0xf]
        %v707 = vld [vmem:[%s3 + $0x28] sm:$0xf]
        %v708 = vld [vmem:[%s3 + $0x2c] sm:$0xf]
        %v709 = vld [vmem:[%s3 + $0x30] sm:$0xf]
        %v710 = vld [vmem:[%s3 + $0x34] sm:$0xf]
        %v711 = vld [vmem:[%s3 + $0x38] sm:$0xf]
        %v712 = vld [vmem:[%s3 + $0x3c] sm:$0xf]
        %v713 = vld [vmem:[%s4] sm:$0x1]
        %v715 = vlaneseq
        %v716 = vshrl.u32 %v715, 7
        %v717 = vsub.s32 0, %v716
        %v718 = vrot.slane %v713, %v717
        %v736 = vunpack.c.l.b16 %v697
        %v737 = vunpack.c.l.b16 %v698
        %v738 = vunpack.c.l.b16 %v699
        %v739 = vunpack.c.l.b16 %v700
        %v740 = vunpack.c.l.b16 %v701
        %v741 = vunpack.c.l.b16 %v702
        %v742 = vunpack.c.l.b16 %v703
        %v743 = vunpack.c.l.b16 %v704
        %v744 = vunpack.c.l.b16 %v705
        %v745 = vunpack.c.l.b16 %v706
        %v746 = vunpack.c.l.b16 %v707
        %v747 = vunpack.c.l.b16 %v708
        %v748 = vunpack.c.l.b16 %v709
        %v749 = vunpack.c.l.b16 %v710
        %v750 = vunpack.c.l.b16 %v711
        %v751 = vunpack.c.l.b16 %v712
        %v752 = vpack.c.b16 %v737, %v736
        %v753 = vpack.c.b16 %v739, %v738
        %v754 = vpack.c.b16 %v741, %v740
        %v755 = vpack.c.b16 %v743, %v742
        %v756 = vpack.c.b16 %v745, %v744
        %v757 = vpack.c.b16 %v747, %v746
        %v758 = vpack.c.b16 %v749, %v748
        %v759 = vpack.c.b16 %v751, %v750
        %768 = vmatprep.subr.bf16.mxu0 0
        %769 = vmatpush1.bf16.msra.mxu0 %v752
        %770 = vmatprep.subr.bf16.mxu0 0
        %771 = vmatpush1.bf16.msra.mxu0 %v753
        %772 = vmatprep.subr.bf16.mxu0 0
        %773 = vmatpush1.bf16.msra.mxu0 %v754
        %774 = vmatprep.subr.bf16.mxu0 0
        %775 = vmatpush1.bf16.msra.mxu0 %v755
        %776 = vmatprep.subr.bf16.mxu0 0
        %777 = vmatpush1.bf16.msra.mxu0 %v756
        %778 = vmatprep.subr.bf16.mxu0 0
        %779 = vmatpush1.bf16.msra.mxu0 %v757
        %780 = vmatprep.subr.bf16.mxu0 0
        %781 = vmatpush1.bf16.msra.mxu0 %v758
        %782 = vmatprep.subr.bf16.mxu0 0
        %783 = vmatpush1.bf16.msra.mxu0 %v759
        %784 = vmatprep.subr.bf16.mxu0 0
        %785 = vmatpush1.bf16.msra.mxu0 0
        %786 = vmatprep.subr.bf16.mxu0 0
        %787 = vmatpush1.bf16.msra.mxu0 0
        %788 = vmatprep.subr.bf16.mxu0 0
        %789 = vmatpush1.bf16.msra.mxu0 0
        %790 = vmatprep.subr.bf16.mxu0 0
        %791 = vmatpush1.bf16.msra.mxu0 0
        %792 = vmatprep.subr.bf16.mxu0 0
        %793 = vmatpush1.bf16.msra.mxu0 0
        %794 = vmatprep.subr.bf16.mxu0 0
        %795 = vmatpush1.bf16.msra.mxu0 0
        %796 = vmatprep.subr.bf16.mxu0 0
        %797 = vmatpush1.bf16.msra.mxu0 0
        %798 = vmatprep.subr.bf16.mxu0 0
        %799 = vmatpush1.bf16.msra.mxu0 0
        %800 = vmatprep.mubr.bf16.mxu0 0
        %801 = vmatmul.mubr.bf16.gmra.mrb[0].mxu0 %v681
        %v802 = vpop.f32.mrb[0].mxu0
        %v803 = vadd.f32 %v718, %v802
        %v804 = vpop.f32.mrb[0].mxu0
        %v805 = vpop.f32.mrb[0].mxu0
        %v806 = vadd.f32 %v718, %v805
        %v807 = vpop.f32.mrb[0].mxu0
        %808 = vmatprep.mubr.bf16.mxu0 0
        %809 = vmatmul.mubr.bf16.gmra.mrb[0].mxu0 %v682
        %v810 = vpop.f32.mrb[0].mxu0
        %v811 = vadd.f32 %v718, %v810
        %v812 = vpop.f32.mrb[0].mxu0
        %v813 = vpop.f32.mrb[0].mxu0
        %v814 = vadd.f32 %v718, %v813
        %v815 = vpop.f32.mrb[0].mxu0
        %816 = vmatprep.mubr.bf16.mxu0 0
        %817 = vmatmul.mubr.bf16.gmra.mrb[0].mxu0 %v683
        %v818 = vpop.f32.mrb[0].mxu0
        %v819 = vadd.f32 %v718, %v818
        %v820 = vpop.f32.mrb[0].mxu0
        %v821 = vpop.f32.mrb[0].mxu0
        %v822 = vadd.f32 %v718, %v821
        %v823 = vpop.f32.mrb[0].mxu0
        %824 = vmatprep.mubr.bf16.mxu0 0
        %825 = vmatmul.mubr.bf16.gmra.mrb[0].mxu0 %v684
        %v826 = vpop.f32.mrb[0].mxu0
        %v827 = vadd.f32 %v718, %v826
        %v828 = vpop.f32.mrb[0].mxu0
        %v829 = vpop.f32.mrb[0].mxu0
        %v830 = vadd.f32 %v718, %v829
        %v831 = vpop.f32.mrb[0].mxu0
        %832 = vmatprep.mubr.bf16.mxu0 0
        %833 = vmatmul.mubr.bf16.gmra.mrb[0].mxu0 %v685
        %v834 = vpop.f32.mrb[0].mxu0
        %v835 = vadd.f32 %v718, %v834
        %v836 = vpop.f32.mrb[0].mxu0
        %v837 = vpop.f32.mrb[0].mxu0
        %v838 = vadd.f32 %v718, %v837
        %v839 = vpop.f32.mrb[0].mxu0
        %840 = vmatprep.mubr.bf16.mxu0 0
        %841 = vmatmul.mubr.bf16.gmra.mrb[0].mxu0 %v686
        %v842 = vpop.f32.mrb[0].mxu0
        %v843 = vadd.f32 %v718, %v842
        %v844 = vpop.f32.mrb[0].mxu0
        %v845 = vpop.f32.mrb[0].mxu0
        %v846 = vadd.f32 %v718, %v845
        %v847 = vpop.f32.mrb[0].mxu0
        %848 = vmatprep.mubr.bf16.mxu0 0
        %849 = vmatmul.mubr.bf16.gmra.mrb[0].mxu0 %v687
        %v850 = vpop.f32.mrb[0].mxu0
        %v851 = vadd.f32 %v718, %v850
        %v852 = vpop.f32.mrb[0].mxu0
        %v853 = vpop.f32.mrb[0].mxu0
        %v854 = vadd.f32 %v718, %v853
        %v855 = vpop.f32.mrb[0].mxu0
        %856 = vmatprep.mubr.bf16.mxu0 0
        %857 = vmatmul.mubr.bf16.gmra.mrb[0].mxu0 %v688
        %v858 = vpop.f32.mrb[0].mxu0
        %v859 = vadd.f32 %v718, %v858
        %v860 = vpop.f32.mrb[0].mxu0
        %v861 = vpop.f32.mrb[0].mxu0
        %v862 = vadd.f32 %v718, %v861
        %v863 = vpop.f32.mrb[0].mxu0
        %864 = vmatprep.mubr.bf16.mxu0 0
        %865 = vmatmul.mubr.bf16.gmra.mrb[0].mxu0 %v689
        %v866 = vpop.f32.mrb[0].mxu0
        %v867 = vadd.f32 %v718, %v866
        %v868 = vpop.f32.mrb[0].mxu0
        %v869 = vpop.f32.mrb[0].mxu0
        %v870 = vadd.f32 %v718, %v869
        %v871 = vpop.f32.mrb[0].mxu0
        %872 = vmatprep.mubr.bf16.mxu0 0
        %873 = vmatmul.mubr.bf16.gmra.mrb[0].mxu0 %v690
        %v874 = vpop.f32.mrb[0].mxu0
        %v875 = vadd.f32 %v718, %v874
        %v876 = vpop.f32.mrb[0].mxu0
        %v877 = vpop.f32.mrb[0].mxu0
        %v878 = vadd.f32 %v718, %v877
        %v879 = vpop.f32.mrb[0].mxu0
        %880 = vmatprep.mubr.bf16.mxu0 0
        %881 = vmatmul.mubr.bf16.gmra.mrb[0].mxu0 %v691
        %v882 = vpop.f32.mrb[0].mxu0
        %v883 = vadd.f32 %v718, %v882
        %v884 = vpop.f32.mrb[0].mxu0
        %v885 = vpop.f32.mrb[0].mxu0
        %v886 = vadd.f32 %v718, %v885
        %v887 = vpop.f32.mrb[0].mxu0
        %888 = vmatprep.mubr.bf16.mxu0 0
        %889 = vmatmul.mubr.bf16.gmra.mrb[0].mxu0 %v692
        %v890 = vpop.f32.mrb[0].mxu0
        %v891 = vadd.f32 %v718, %v890
        %v892 = vpop.f32.mrb[0].mxu0
        %v893 = vpop.f32.mrb[0].mxu0
        %v894 = vadd.f32 %v718, %v893
        %v895 = vpop.f32.mrb[0].mxu0
        %896 = vmatprep.mubr.bf16.mxu0 0
        %897 = vmatmul.mubr.bf16.gmra.mrb[0].mxu0 %v693
        %v898 = vpop.f32.mrb[0].mxu0
        %v899 = vadd.f32 %v718, %v898
        %v900 = vpop.f32.mrb[0].mxu0
        %v901 = vpop.f32.mrb[0].mxu0
        %v902 = vadd.f32 %v718, %v901
        %v903 = vpop.f32.mrb[0].mxu0
        %904 = vmatprep.mubr.bf16.mxu0 0
        %905 = vmatmul.mubr.bf16.gmra.mrb[0].mxu0 %v694
        %v906 = vpop.f32.mrb[0].mxu0
        %v907 = vadd.f32 %v718, %v906
        %v908 = vpop.f32.mrb[0].mxu0
        %v909 = vpop.f32.mrb[0].mxu0
        %v910 = vadd.f32 %v718, %v909
        %v911 = vpop.f32.mrb[0].mxu0
        %912 = vmatprep.mubr.bf16.mxu0 0
        %913 = vmatmul.mubr.bf16.gmra.mrb[0].mxu0 %v695
        %v914 = vpop.f32.mrb[0].mxu0
        %v915 = vadd.f32 %v718, %v914
        %v916 = vpop.f32.mrb[0].mxu0
        %v917 = vpop.f32.mrb[0].mxu0
        %v918 = vadd.f32 %v718, %v917
        %v919 = vpop.f32.mrb[0].mxu0
        %920 = vmatprep.mubr.bf16.mxu0 0
        %921 = vmatmul.mubr.bf16.gmra.mrb[0].mxu0 %v696
        %v922 = vpop.f32.mrb[0].mxu0
        %v923 = vadd.f32 %v718, %v922
        %v924 = vpop.f32.mrb[0].mxu0
        %v925 = vpop.f32.mrb[0].mxu0
        %v926 = vadd.f32 %v718, %v925
        %v927 = vpop.f32.mrb[0].mxu0
        %928 = vdwg.mxu0
        %v929 = vmax.f32 %v803, 0.0
        %v930 = vmax.f32 %v806, 0.0
        %v931 = vmax.f32 %v811, 0.0
        %v932 = vmax.f32 %v814, 0.0
        %v933 = vmax.f32 %v819, 0.0
        %v934 = vmax.f32 %v822, 0.0
        %v935 = vmax.f32 %v827, 0.0
        %v936 = vmax.f32 %v830, 0.0
        %v937 = vmax.f32 %v835, 0.0
        %v938 = vmax.f32 %v838, 0.0
        %v939 = vmax.f32 %v843, 0.0
        %v940 = vmax.f32 %v846, 0.0
        %v941 = vmax.f32 %v851, 0.0
        %v942 = vmax.f32 %v854, 0.0
        %v943 = vmax.f32 %v859, 0.0
        %v944 = vmax.f32 %v862, 0.0
        %v945 = vmax.f32 %v867, 0.0
        %v946 = vmax.f32 %v870, 0.0
        %v947 = vmax.f32 %v875, 0.0
        %v948 = vmax.f32 %v878, 0.0
        %v949 = vmax.f32 %v883, 0.0
        %v950 = vmax.f32 %v886, 0.0
        %v951 = vmax.f32 %v891, 0.0
        %v952 = vmax.f32 %v894, 0.0
        %v953 = vmax.f32 %v899, 0.0
        %v954 = vmax.f32 %v902, 0.0
        %v955 = vmax.f32 %v907, 0.0
        %v956 = vmax.f32 %v910, 0.0
        %v957 = vmax.f32 %v915, 0.0
        %v958 = vmax.f32 %v918, 0.0
        %v959 = vmax.f32 %v923, 0.0
        %v960 = vmax.f32 %v926, 0.0
        %v961 = vpack.c.bf16 %v930, %v929
        %v962 = vpack.c.bf16 %v932, %v931
        %v963 = vpack.c.bf16 %v934, %v933
        %v964 = vpack.c.bf16 %v936, %v935
        %v965 = vpack.c.bf16 %v938, %v937
        %v966 = vpack.c.bf16 %v940, %v939
        %v967 = vpack.c.bf16 %v942, %v941
        %v968 = vpack.c.bf16 %v944, %v943
        %v969 = vpack.c.bf16 %v946, %v945
        %v970 = vpack.c.bf16 %v948, %v947
        %v971 = vpack.c.bf16 %v950, %v949
        %v972 = vpack.c.bf16 %v952, %v951
        %v973 = vpack.c.bf16 %v954, %v953
        %v974 = vpack.c.bf16 %v956, %v955
        %v975 = vpack.c.bf16 %v958, %v957
        %v976 = vpack.c.bf16 %v960, %v959
        %v977 = vld [vmem:[%s5] sm:$0xf]
        %v978 = vld [vmem:[%s5 + $0x4] sm:$0xf]
        %v979 = vld [vmem:[%s5 + $0x8] sm:$0xf]
        %v980 = vld [vmem:[%s5 + $0xc] sm:$0xf]
        %v981 = vld [vmem:[%s5 + $0x10] sm:$0xf]
        %v982 = vld [vmem:[%s5 + $0x14] sm:$0xf]
        %v983 = vld [vmem:[%s5 + $0x18] sm:$0xf]
        %v984 = vld [vmem:[%s5 + $0x1c] sm:$0xf]
        %v985 = vld [vmem:[%s5 + $0x20] sm:$0xf]
        %v986 = vld [vmem:[%s5 + $0x24] sm:$0xf]
        %v987 = vld [vmem:[%s5 + $0x28] sm:$0xf]
        %v988 = vld [vmem:[%s5 + $0x2c] sm:$0xf]
        %v989 = vld [vmem:[%s5 + $0x30] sm:$0xf]
        %v990 = vld [vmem:[%s5 + $0x34] sm:$0xf]
        %v991 = vld [vmem:[%s5 + $0x38] sm:$0xf]
        %v992 = vld [vmem:[%s5 + $0x3c] sm:$0xf]
        %v993 = vld [vmem:[%s6] sm:$0x1]
        %v995 = vlaneseq
        %v996 = vshrl.u32 %v995, 7
        %v997 = vsub.s32 0, %v996
        %v998 = vrot.slane %v993, %v997
        %v1016 = vunpack.c.l.b16 %v977
        %v1017 = vunpack.c.l.b16 %v978
        %v1018 = vunpack.c.l.b16 %v979
        %v1019 = vunpack.c.l.b16 %v980
        %v1020 = vunpack.c.l.b16 %v981
        %v1021 = vunpack.c.l.b16 %v982
        %v1022 = vunpack.c.l.b16 %v983
        %v1023 = vunpack.c.l.b16 %v984
        %v1024 = vunpack.c.l.b16 %v985
        %v1025 = vunpack.c.l.b16 %v986
        %v1026 = vunpack.c.l.b16 %v987
        %v1027 = vunpack.c.l.b16 %v988
        %v1028 = vunpack.c.l.b16 %v989
        %v1029 = vunpack.c.l.b16 %v990
        %v1030 = vunpack.c.l.b16 %v991
        %v1031 = vunpack.c.l.b16 %v992
        %v1032 = vpack.c.b16 %v1017, %v1016
        %v1033 = vpack.c.b16 %v1019, %v1018
        %v1034 = vpack.c.b16 %v1021, %v1020
        %v1035 = vpack.c.b16 %v1023, %v1022
        %v1036 = vpack.c.b16 %v1025, %v1024
        %v1037 = vpack.c.b16 %v1027, %v1026
        %v1038 = vpack.c.b16 %v1029, %v1028
        %v1039 = vpack.c.b16 %v1031, %v1030
        %1048 = vmatprep.subr.bf16.mxu0 0
        %1049 = vmatpush1.bf16.msra.mxu0 %v1032
        %1050 = vmatprep.subr.bf16.mxu0 0
        %1051 = vmatpush1.bf16.msra.mxu0 %v1033
        %1052 = vmatprep.subr.bf16.mxu0 0
        %1053 = vmatpush1.bf16.msra.mxu0 %v1034
        %1054 = vmatprep.subr.bf16.mxu0 0
        %1055 = vmatpush1.bf16.msra.mxu0 %v1035
        %1056 = vmatprep.subr.bf16.mxu0 0
        %1057 = vmatpush1.bf16.msra.mxu0 %v1036
        %1058 = vmatprep.subr.bf16.mxu0 0
        %1059 = vmatpush1.bf16.msra.mxu0 %v1037
        %1060 = vmatprep.subr.bf16.mxu0 0
        %1061 = vmatpush1.bf16.msra.mxu0 %v1038
        %1062 = vmatprep.subr.bf16.mxu0 0
        %1063 = vmatpush1.bf16.msra.mxu0 %v1039
        %1064 = vmatprep.subr.bf16.mxu0 0
        %1065 = vmatpush1.bf16.msra.mxu0 0
        %1066 = vmatprep.subr.bf16.mxu0 0
        %1067 = vmatpush1.bf16.msra.mxu0 0
        %1068 = vmatprep.subr.bf16.mxu0 0
        %1069 = vmatpush1.bf16.msra.mxu0 0
        %1070 = vmatprep.subr.bf16.mxu0 0
        %1071 = vmatpush1.bf16.msra.mxu0 0
        %1072 = vmatprep.subr.bf16.mxu0 0
        %1073 = vmatpush1.bf16.msra.mxu0 0
        %1074 = vmatprep.subr.bf16.mxu0 0
        %1075 = vmatpush1.bf16.msra.mxu0 0
        %1076 = vmatprep.subr.bf16.mxu0 0
        %1077 = vmatpush1.bf16.msra.mxu0 0
        %1078 = vmatprep.subr.bf16.mxu0 0
        %1079 = vmatpush1.bf16.msra.mxu0 0
        %1080 = vmatprep.mubr.bf16.mxu0 0
        %1081 = vmatmul.mubr.bf16.gmra.mrb[0].mxu0 %v961
        %v1082 = vpop.f32.mrb[0].mxu0
        %v1083 = vadd.f32 %v998, %v1082
        %v1084 = vpop.f32.mrb[0].mxu0
        %v1085 = vpop.f32.mrb[0].mxu0
        %v1086 = vadd.f32 %v998, %v1085
        %v1087 = vpop.f32.mrb[0].mxu0
        %1088 = vmatprep.mubr.bf16.mxu0 0
        %1089 = vmatmul.mubr.bf16.gmra.mrb[0].mxu0 %v962
        %v1090 = vpop.f32.mrb[0].mxu0
        %v1091 = vadd.f32 %v998, %v1090
        %v1092 = vpop.f32.mrb[0].mxu0
        %v1093 = vpop.f32.mrb[0].mxu0
        %v1094 = vadd.f32 %v998, %v1093
        %v1095 = vpop.f32.mrb[0].mxu0
        %1096 = vmatprep.mubr.bf16.mxu0 0
        %1097 = vmatmul.mubr.bf16.gmra.mrb[0].mxu0 %v963
        %v1098 = vpop.f32.mrb[0].mxu0
        %v1099 = vadd.f32 %v998, %v1098
        %v1100 = vpop.f32.mrb[0].mxu0
        %v1101 = vpop.f32.mrb[0].mxu0
        %v1102 = vadd.f32 %v998, %v1101
        %v1103 = vpop.f32.mrb[0].mxu0
        %1104 = vmatprep.mubr.bf16.mxu0 0
        %1105 = vmatmul.mubr.bf16.gmra.mrb[0].mxu0 %v964
        %v1106 = vpop.f32.mrb[0].mxu0
        %v1107 = vadd.f32 %v998, %v1106
        %v1108 = vpop.f32.mrb[0].mxu0
        %v1109 = vpop.f32.mrb[0].mxu0
        %v1110 = vadd.f32 %v998, %v1109
        %v1111 = vpop.f32.mrb[0].mxu0
        %1112 = vmatprep.mubr.bf16.mxu0 0
        %1113 = vmatmul.mubr.bf16.gmra.mrb[0].mxu0 %v965
        %v1114 = vpop.f32.mrb[0].mxu0
        %v1115 = vadd.f32 %v998, %v1114
        %v1116 = vpop.f32.mrb[0].mxu0
        %v1117 = vpop.f32.mrb[0].mxu0
        %v1118 = vadd.f32 %v998, %v1117
        %v1119 = vpop.f32.mrb[0].mxu0
        %1120 = vmatprep.mubr.bf16.mxu0 0
        %1121 = vmatmul.mubr.bf16.gmra.mrb[0].mxu0 %v966
        %v1122 = vpop.f32.mrb[0].mxu0
        %v1123 = vadd.f32 %v998, %v1122
        %v1124 = vpop.f32.mrb[0].mxu0
        %v1125 = vpop.f32.mrb[0].mxu0
        %v1126 = vadd.f32 %v998, %v1125
        %v1127 = vpop.f32.mrb[0].mxu0
        %1128 = vmatprep.mubr.bf16.mxu0 0
        %1129 = vmatmul.mubr.bf16.gmra.mrb[0].mxu0 %v967
        %v1130 = vpop.f32.mrb[0].mxu0
        %v1131 = vadd.f32 %v998, %v1130
        %v1132 = vpop.f32.mrb[0].mxu0
        %v1133 = vpop.f32.mrb[0].mxu0
        %v1134 = vadd.f32 %v998, %v1133
        %v1135 = vpop.f32.mrb[0].mxu0
        %1136 = vmatprep.mubr.bf16.mxu0 0
        %1137 = vmatmul.mubr.bf16.gmra.mrb[0].mxu0 %v968
        %v1138 = vpop.f32.mrb[0].mxu0
        %v1139 = vadd.f32 %v998, %v1138
        %v1140 = vpop.f32.mrb[0].mxu0
        %v1141 = vpop.f32.mrb[0].mxu0
        %v1142 = vadd.f32 %v998, %v1141
        %v1143 = vpop.f32.mrb[0].mxu0
        %1144 = vmatprep.mubr.bf16.mxu0 0
        %1145 = vmatmul.mubr.bf16.gmra.mrb[0].mxu0 %v969
        %v1146 = vpop.f32.mrb[0].mxu0
        %v1147 = vadd.f32 %v998, %v1146
        %v1148 = vpop.f32.mrb[0].mxu0
        %v1149 = vpop.f32.mrb[0].mxu0
        %v1150 = vadd.f32 %v998, %v1149
        %v1151 = vpop.f32.mrb[0].mxu0
        %1152 = vmatprep.mubr.bf16.mxu0 0
        %1153 = vmatmul.mubr.bf16.gmra.mrb[0].mxu0 %v970
        %v1154 = vpop.f32.mrb[0].mxu0
        %v1155 = vadd.f32 %v998, %v1154
        %v1156 = vpop.f32.mrb[0].mxu0
        %v1157 = vpop.f32.mrb[0].mxu0
        %v1158 = vadd.f32 %v998, %v1157
        %v1159 = vpop.f32.mrb[0].mxu0
        %1160 = vmatprep.mubr.bf16.mxu0 0
        %1161 = vmatmul.mubr.bf16.gmra.mrb[0].mxu0 %v971
        %v1162 = vpop.f32.mrb[0].mxu0
        %v1163 = vadd.f32 %v998, %v1162
        %v1164 = vpop.f32.mrb[0].mxu0
        %v1165 = vpop.f32.mrb[0].mxu0
        %v1166 = vadd.f32 %v998, %v1165
        %v1167 = vpop.f32.mrb[0].mxu0
        %1168 = vmatprep.mubr.bf16.mxu0 0
        %1169 = vmatmul.mubr.bf16.gmra.mrb[0].mxu0 %v972
        %v1170 = vpop.f32.mrb[0].mxu0
        %v1171 = vadd.f32 %v998, %v1170
        %v1172 = vpop.f32.mrb[0].mxu0
        %v1173 = vpop.f32.mrb[0].mxu0
        %v1174 = vadd.f32 %v998, %v1173
        %v1175 = vpop.f32.mrb[0].mxu0
        %1176 = vmatprep.mubr.bf16.mxu0 0
        %1177 = vmatmul.mubr.bf16.gmra.mrb[0].mxu0 %v973
        %v1178 = vpop.f32.mrb[0].mxu0
        %v1179 = vadd.f32 %v998, %v1178
        %v1180 = vpop.f32.mrb[0].mxu0
        %v1181 = vpop.f32.mrb[0].mxu0
        %v1182 = vadd.f32 %v998, %v1181
        %v1183 = vpop.f32.mrb[0].mxu0
        %1184 = vmatprep.mubr.bf16.mxu0 0
        %1185 = vmatmul.mubr.bf16.gmra.mrb[0].mxu0 %v974
        %v1186 = vpop.f32.mrb[0].mxu0
        %v1187 = vadd.f32 %v998, %v1186
        %v1188 = vpop.f32.mrb[0].mxu0
        %v1189 = vpop.f32.mrb[0].mxu0
        %v1190 = vadd.f32 %v998, %v1189
        %v1191 = vpop.f32.mrb[0].mxu0
        %1192 = vmatprep.mubr.bf16.mxu0 0
        %1193 = vmatmul.mubr.bf16.gmra.mrb[0].mxu0 %v975
        %v1194 = vpop.f32.mrb[0].mxu0
        %v1195 = vadd.f32 %v998, %v1194
        %v1196 = vpop.f32.mrb[0].mxu0
        %v1197 = vpop.f32.mrb[0].mxu0
        %v1198 = vadd.f32 %v998, %v1197
        %v1199 = vpop.f32.mrb[0].mxu0
        %1200 = vmatprep.mubr.bf16.mxu0 0
        %1201 = vmatmul.mubr.bf16.gmra.mrb[0].mxu0 %v976
        %v1202 = vpop.f32.mrb[0].mxu0
        %v1203 = vadd.f32 %v998, %v1202
        %v1204 = vpop.f32.mrb[0].mxu0
        %v1205 = vpop.f32.mrb[0].mxu0
        %v1206 = vadd.f32 %v998, %v1205
        %v1207 = vpop.f32.mrb[0].mxu0
        %1208 = vdwg.mxu0
        %v1209 = vmax.f32 %v1083, 0.0
        %v1210 = vmax.f32 %v1086, 0.0
        %v1211 = vmax.f32 %v1091, 0.0
        %v1212 = vmax.f32 %v1094, 0.0
        %v1213 = vmax.f32 %v1099, 0.0
        %v1214 = vmax.f32 %v1102, 0.0
        %v1215 = vmax.f32 %v1107, 0.0
        %v1216 = vmax.f32 %v1110, 0.0
        %v1217 = vmax.f32 %v1115, 0.0
        %v1218 = vmax.f32 %v1118, 0.0
        %v1219 = vmax.f32 %v1123, 0.0
        %v1220 = vmax.f32 %v1126, 0.0
        %v1221 = vmax.f32 %v1131, 0.0
        %v1222 = vmax.f32 %v1134, 0.0
        %v1223 = vmax.f32 %v1139, 0.0
        %v1224 = vmax.f32 %v1142, 0.0
        %v1225 = vmax.f32 %v1147, 0.0
        %v1226 = vmax.f32 %v1150, 0.0
        %v1227 = vmax.f32 %v1155, 0.0
        %v1228 = vmax.f32 %v1158, 0.0
        %v1229 = vmax.f32 %v1163, 0.0
        %v1230 = vmax.f32 %v1166, 0.0
        %v1231 = vmax.f32 %v1171, 0.0
        %v1232 = vmax.f32 %v1174, 0.0
        %v1233 = vmax.f32 %v1179, 0.0
        %v1234 = vmax.f32 %v1182, 0.0
        %v1235 = vmax.f32 %v1187, 0.0
        %v1236 = vmax.f32 %v1190, 0.0
        %v1237 = vmax.f32 %v1195, 0.0
        %v1238 = vmax.f32 %v1198, 0.0
        %v1239 = vmax.f32 %v1203, 0.0
        %v1240 = vmax.f32 %v1206, 0.0
        %1242 = vset.pattern.permute.xlu0 7
        %1243 = vperm.xlu0 %1242, %v315
        %v1244 = vpop.permute.xlu0 %1243
        %1247 = vset.pattern.permute.xlu0 7
        %1248 = vperm.xlu0 %1247, %v316
        %v1249 = vpop.permute.xlu0 %1248
        %1252 = vset.pattern.permute.xlu0 7
        %1253 = vperm.xlu0 %1252, %v317
        %v1254 = vpop.permute.xlu0 %1253
        %1257 = vset.pattern.permute.xlu0 7
        %1258 = vperm.xlu0 %1257, %v318
        %v1259 = vpop.permute.xlu0 %1258
        %1262 = vset.pattern.permute.xlu0 7
        %1263 = vperm.xlu0 %1262, %v319
        %v1264 = vpop.permute.xlu0 %1263
        %1267 = vset.pattern.permute.xlu0 7
        %1268 = vperm.xlu0 %1267, %v320
        %v1269 = vpop.permute.xlu0 %1268
        %1272 = vset.pattern.permute.xlu0 7
        %1273 = vperm.xlu0 %1272, %v321
        %v1274 = vpop.permute.xlu0 %1273
        %1277 = vset.pattern.permute.xlu0 7
        %1278 = vperm.xlu0 %1277, %v322
        %v1279 = vpop.permute.xlu0 %1278
        %1282 = vset.pattern.permute.xlu0 7
        %1283 = vperm.xlu0 %1282, %v323
        %v1284 = vpop.permute.xlu0 %1283
        %1287 = vset.pattern.permute.xlu0 7
        %1288 = vperm.xlu0 %1287, %v324
        %v1289 = vpop.permute.xlu0 %1288
        %1292 = vset.pattern.permute.xlu0 7
        %1293 = vperm.xlu0 %1292, %v325
        %v1294 = vpop.permute.xlu0 %1293
        %1297 = vset.pattern.permute.xlu0 7
        %1298 = vperm.xlu0 %1297, %v326
        %v1299 = vpop.permute.xlu0 %1298
        %1302 = vset.pattern.permute.xlu0 7
        %1303 = vperm.xlu0 %1302, %v327
        %v1304 = vpop.permute.xlu0 %1303
        %1307 = vset.pattern.permute.xlu0 7
        %1308 = vperm.xlu0 %1307, %v328
        %v1309 = vpop.permute.xlu0 %1308
        %1312 = vset.pattern.permute.xlu0 7
        %1313 = vperm.xlu0 %1312, %v329
        %v1314 = vpop.permute.xlu0 %1313
        %1317 = vset.pattern.permute.xlu0 7
        %1318 = vperm.xlu0 %1317, %v330
        %v1319 = vpop.permute.xlu0 %1318
        %1322 = vset.pattern.permute.xlu0 7
        %1323 = vperm.xlu0 %1322, %v331
        %v1324 = vpop.permute.xlu0 %1323
        %1327 = vset.pattern.permute.xlu0 7
        %1328 = vperm.xlu0 %1327, %v332
        %v1329 = vpop.permute.xlu0 %1328
        %1332 = vset.pattern.permute.xlu0 7
        %1333 = vperm.xlu0 %1332, %v333
        %v1334 = vpop.permute.xlu0 %1333
        %1337 = vset.pattern.permute.xlu0 7
        %1338 = vperm.xlu0 %1337, %v334
        %v1339 = vpop.permute.xlu0 %1338
        %1342 = vset.pattern.permute.xlu0 7
        %1343 = vperm.xlu0 %1342, %v335
        %v1344 = vpop.permute.xlu0 %1343
        %1347 = vset.pattern.permute.xlu0 7
        %1348 = vperm.xlu0 %1347, %v336
        %v1349 = vpop.permute.xlu0 %1348
        %1352 = vset.pattern.permute.xlu0 7
        %1353 = vperm.xlu0 %1352, %v337
        %v1354 = vpop.permute.xlu0 %1353
        %1357 = vset.pattern.permute.xlu0 7
        %1358 = vperm.xlu0 %1357, %v338
        %v1359 = vpop.permute.xlu0 %1358
        %1362 = vset.pattern.permute.xlu0 7
        %1363 = vperm.xlu0 %1362, %v339
        %v1364 = vpop.permute.xlu0 %1363
        %1367 = vset.pattern.permute.xlu0 7
        %1368 = vperm.xlu0 %1367, %v340
        %v1369 = vpop.permute.xlu0 %1368
        %1372 = vset.pattern.permute.xlu0 7
        %1373 = vperm.xlu0 %1372, %v341
        %v1374 = vpop.permute.xlu0 %1373
        %1377 = vset.pattern.permute.xlu0 7
        %1378 = vperm.xlu0 %1377, %v342
        %v1379 = vpop.permute.xlu0 %1378
        %1382 = vset.pattern.permute.xlu0 7
        %1383 = vperm.xlu0 %1382, %v343
        %v1384 = vpop.permute.xlu0 %1383
        %1387 = vset.pattern.permute.xlu0 7
        %1388 = vperm.xlu0 %1387, %v344
        %v1389 = vpop.permute.xlu0 %1388
        %1392 = vset.pattern.permute.xlu0 7
        %1393 = vperm.xlu0 %1392, %v345
        %v1394 = vpop.permute.xlu0 %1393
        %1397 = vset.pattern.permute.xlu0 7
        %1398 = vperm.xlu0 %1397, %v346
        %v1399 = vpop.permute.xlu0 %1398
        %v1401 = vadd.f32 %v1209, %v1244
        %v1402 = vadd.f32 %v1210, %v1249
        %v1403 = vadd.f32 %v1211, %v1254
        %v1404 = vadd.f32 %v1212, %v1259
        %v1405 = vadd.f32 %v1213, %v1264
        %v1406 = vadd.f32 %v1214, %v1269
        %v1407 = vadd.f32 %v1215, %v1274
        %v1408 = vadd.f32 %v1216, %v1279
        %v1409 = vadd.f32 %v1217, %v1284
        %v1410 = vadd.f32 %v1218, %v1289
        %v1411 = vadd.f32 %v1219, %v1294
        %v1412 = vadd.f32 %v1220, %v1299
        %v1413 = vadd.f32 %v1221, %v1304
        %v1414 = vadd.f32 %v1222, %v1309
        %v1415 = vadd.f32 %v1223, %v1314
        %v1416 = vadd.f32 %v1224, %v1319
        %v1417 = vadd.f32 %v1225, %v1324
        %v1418 = vadd.f32 %v1226, %v1329
        %v1419 = vadd.f32 %v1227, %v1334
        %v1420 = vadd.f32 %v1228, %v1339
        %v1421 = vadd.f32 %v1229, %v1344
        %v1422 = vadd.f32 %v1230, %v1349
        %v1423 = vadd.f32 %v1231, %v1354
        %v1424 = vadd.f32 %v1232, %v1359
        %v1425 = vadd.f32 %v1233, %v1364
        %v1426 = vadd.f32 %v1234, %v1369
        %v1427 = vadd.f32 %v1235, %v1374
        %v1428 = vadd.f32 %v1236, %v1379
        %v1429 = vadd.f32 %v1237, %v1384
        %v1430 = vadd.f32 %v1238, %v1389
        %v1431 = vadd.f32 %v1239, %v1394
        %v1432 = vadd.f32 %v1240, %v1399
        %v1433 = vmax.f32 %v1401, %v1402
        %v1434 = vmax.f32 %v1433, %v1403
        %v1435 = vmax.f32 %v1434, %v1404
        %v1436 = vrot.slane %v1435, 4
        %v1437 = vmax.f32 %v1435, %v1436
        %v1438 = vrot.slane %v1437, 2
        %v1439 = vmax.f32 %v1437, %v1438
        %v1440 = vrot.slane %v1439, 1
        %v1441 = vmax.f32 %v1439, %v1440
        %v1442 = vmax.f32 %v1405, %v1406
        %v1443 = vmax.f32 %v1442, %v1407
        %v1444 = vmax.f32 %v1443, %v1408
        %v1445 = vrot.slane %v1444, 4
        %v1446 = vmax.f32 %v1444, %v1445
        %v1447 = vrot.slane %v1446, 2
        %v1448 = vmax.f32 %v1446, %v1447
        %v1449 = vrot.slane %v1448, 1
        %v1450 = vmax.f32 %v1448, %v1449
        %v1451 = vmax.f32 %v1409, %v1410
        %v1452 = vmax.f32 %v1451, %v1411
        %v1453 = vmax.f32 %v1452, %v1412
        %v1454 = vrot.slane %v1453, 4
        %v1455 = vmax.f32 %v1453, %v1454
        %v1456 = vrot.slane %v1455, 2
        %v1457 = vmax.f32 %v1455, %v1456
        %v1458 = vrot.slane %v1457, 1
        %v1459 = vmax.f32 %v1457, %v1458
        %v1460 = vmax.f32 %v1413, %v1414
        %v1461 = vmax.f32 %v1460, %v1415
        %v1462 = vmax.f32 %v1461, %v1416
        %v1463 = vrot.slane %v1462, 4
        %v1464 = vmax.f32 %v1462, %v1463
        %v1465 = vrot.slane %v1464, 2
        %v1466 = vmax.f32 %v1464, %v1465
        %v1467 = vrot.slane %v1466, 1
        %v1468 = vmax.f32 %v1466, %v1467
        %v1469 = vmax.f32 %v1417, %v1418
        %v1470 = vmax.f32 %v1469, %v1419
        %v1471 = vmax.f32 %v1470, %v1420
        %v1472 = vrot.slane %v1471, 4
        %v1473 = vmax.f32 %v1471, %v1472
        %v1474 = vrot.slane %v1473, 2
        %v1475 = vmax.f32 %v1473, %v1474
        %v1476 = vrot.slane %v1475, 1
        %v1477 = vmax.f32 %v1475, %v1476
        %v1478 = vmax.f32 %v1421, %v1422
        %v1479 = vmax.f32 %v1478, %v1423
        %v1480 = vmax.f32 %v1479, %v1424
        %v1481 = vrot.slane %v1480, 4
        %v1482 = vmax.f32 %v1480, %v1481
        %v1483 = vrot.slane %v1482, 2
        %v1484 = vmax.f32 %v1482, %v1483
        %v1485 = vrot.slane %v1484, 1
        %v1486 = vmax.f32 %v1484, %v1485
        %v1487 = vmax.f32 %v1425, %v1426
        %v1488 = vmax.f32 %v1487, %v1427
        %v1489 = vmax.f32 %v1488, %v1428
        %v1490 = vrot.slane %v1489, 4
        %v1491 = vmax.f32 %v1489, %v1490
        %v1492 = vrot.slane %v1491, 2
        %v1493 = vmax.f32 %v1491, %v1492
        %v1494 = vrot.slane %v1493, 1
        %v1495 = vmax.f32 %v1493, %v1494
        %v1496 = vmax.f32 %v1429, %v1430
        %v1497 = vmax.f32 %v1496, %v1431
        %v1498 = vmax.f32 %v1497, %v1432
        %v1499 = vrot.slane %v1498, 4
        %v1500 = vmax.f32 %v1498, %v1499
        %v1501 = vrot.slane %v1500, 2
        %v1502 = vmax.f32 %v1500, %v1501
        %v1503 = vrot.slane %v1502, 1
        %v1504 = vmax.f32 %v1502, %v1503
        %vm1513 = vcmask 1041409
        %v1514 = vsel %vm1513, %v1450, %v1441
        %vm1515 = vcmask 1042434
        %v1516 = vsel %vm1515, %v1459, %v1514
        %vm1517 = vcmask 1043459
        %v1518 = vsel %vm1517, %v1468, %v1516
        %vm1519 = vcmask 1044484
        %v1520 = vsel %vm1519, %v1477, %v1518
        %vm1521 = vcmask 1045509
        %v1522 = vsel %vm1521, %v1486, %v1520
        %vm1523 = vcmask 1046534
        %v1524 = vsel %vm1523, %v1495, %v1522
        %vm1525 = vcmask 1047559
        %v1526 = vsel %vm1525, %v1504, %v1524
        %1528 = vst [vmem:[%s274] sm:$0xff] %v1526
        %s1529 = sand.u32 %s181, 1
        %s1530 = scalar_lea.sflag [#allocation3], %s1529
        %s1531 = sand.u32 %s181, 1
        %s1532 = smul.addr %s1531, 8
        %s1533 = scalar_lea.vmem [#allocation2], %s1532
        // Predicated region
        $region49: #{tpu_custom_call.1} parent=47 // pred_check
          %p1534 = pneg %p191
        $region50: #{tpu_custom_call.1} parent=47 // pred_check_branch
          %1536 = sbr.rel (%p1534) target = $region52
        $region51: #{tpu_custom_call.1} parent=47 // pred_region
          %s1538 = ssub.s32 128, 128
          %1539 = vsyncadd %s1530, %s1538
          %s1540 = smul.addr %s21, 128
          %s1541 = scalar_lea.hbm %s7, %s1540
          %s1543 = sshll.u32 %s1533, 4
          %s1544 = int_to_ptr.vmem [resolvable:$true] %s1543
          %1546 = dma.vmem_to_hbm [thread:$0]  %s1544, 128, %s1541, %s1530
        $region52: #{tpu_custom_call.1} parent=47 // pred_fallthru
          _
      $region48: #{tpu_custom_call.1} parent=5 // pred_fallthru
        _
      %p1547 = scmp.le.s32.totalorder 2, %s16
      // Predicated region
      $region53: #{tpu_custom_call.1} parent=5 // pred_check
        %p1548 = pneg %p1547
      $region54: #{tpu_custom_call.1} parent=5 // pred_check_branch
        %1550 = sbr.rel (%p1548) target = $region56
      $region55: #{tpu_custom_call.1} parent=5 // pred_region
        %s1551 = ssub.s32 %s16, 2
        // Predicated region
        $region57: #{tpu_custom_call.1} parent=55 // pred_check
          %p1552 = pneg %p197
        $region58: #{tpu_custom_call.1} parent=55 // pred_check_branch
          %1554 = sbr.rel (%p1552) target = $region60
        $region59: #{tpu_custom_call.1} parent=55 // pred_region
          %s1555 = sand.u32 %s182, 1
          %s1556 = scalar_lea.sflag [#allocation3], %s1555
          %s1557 = sand.u32 %s182, 1
          %s1558 = smul.addr %s1557, 8
          %s1559 = scalar_lea.vmem [#allocation2], %s1558
          %1560 = dma.done %s1556, 128
        $region60: #{tpu_custom_call.1} parent=55 // pred_fallthru
          _
      $region56: #{tpu_custom_call.1} parent=5 // pred_fallthru
        _
    $region6: #{tpu_custom_call.1} parent=1 // loop_footer
      %s20 = sadd.s32 1, %s16
    $region7: #{tpu_custom_call.1} parent=1 // loop_footer_branch
      %15 = sbr.rel target = $region3
    $region8: #{tpu_custom_call.1} parent=1 // loop_exit
      _
    %1561 = vsyncpa [#allocation3], 1
    %s1562 = scalar_lea.sflag [#allocation3], 1
    %1563 = vsyncpa %s1562, 1

</llo_original>
